<compile_context>
chip_gen: v7x
topology: tpu7x:2x2x1
jax: 0.10.0
libtpu: 0.0.40
codegen_flags: <defaults>
</compile_context>

<pallas_src>
import functools

import jax
import jax.numpy as jnp
from jax.experimental import pallas as pl
from jax.experimental.pallas import tpu as pltpu


def _round_up(x, m):
    return ((x + m - 1) // m) * m


def _pick_time_chunk(Tm1, max_unroll=32):
    """Timesteps per grid step. Must divide Tm1 and be ==Tm1 or a multiple of 8
    (BlockSpec second-to-last-dim rule)."""
    if Tm1 <= max_unroll:
        return Tm1
    c = max_unroll - (max_unroll % 8)
    while c >= 8:
        if Tm1 % c == 0:
            return c
        c -= 8
    return Tm1  # fallback: single chunk (block == full dim is always legal)


def _pick_batch_block(B):
    """Split the batch in two (parallel grid axis -> v7x megacore) only when each
    half still fills >=8 sublanes and stays 8-aligned."""
    if B % 2 == 0 and (B // 2) % 8 == 0 and (B // 2) >= 8:
        return B // 2
    return B


def encoder_lstm_kernel(x_ref, attn_ref, w_ih_ref, w_hh_ref, b_ref,
                        w_out_ref, e_out_ref, h_sc, c_sc):
    """One (batch-block, time-chunk) grid cell of the encoder recurrence.

    grid = (batch blocks [parallel], time chunks [arbitrary / sequential]).
    The time-invariant input attention arrives as a precomputed (bb, N) weight.
    The chunk's input-side gate projection is one MXU call; the unrolled loop
    then only does the sequential h @ w_hh matmul + gate nonlinearities,
    carrying h/c across chunks in VMEM scratch.
    """
    t_chunk = pl.program_id(1)

    @pl.when(t_chunk == 0)
    def _():
        h_sc[...] = jnp.zeros_like(h_sc)
        c_sc[...] = jnp.zeros_like(c_sc)

    bb, Tc, N = x_ref.shape
    Hp = h_sc.shape[-1]

    attn = attn_ref[...]                               # (bb, N)   t-invariant attention
    x = x_ref[...]                                     # (bb, Tc, N)
    weighted = attn[:, None, :] * x                    # (bb, Tc, N)
    w_out_ref[...] = weighted                          # single dense chunk store

    # Input-side gate projection for the whole chunk: ONE MXU call (hoisted out
    # of the sequential recurrence). Gate columns are zero-padded to Hp so the
    # slices below are 128-lane aligned.
    w_ih = w_ih_ref[...]                               # (N, 4*Hp)
    pre = jnp.dot(weighted.reshape(bb * Tc, N).astype(w_ih.dtype), w_ih,
                  preferred_element_type=jnp.float32) + b_ref[...]   # (bb*Tc, 4Hp)
    pre = pre.reshape(bb, Tc, 4 * Hp)

    w_hh = w_hh_ref[...]                               # (Hp, 4*Hp)
    h = h_sc[...]                                      # (bb, Hp)
    c = c_sc[...]                                      # (bb, Hp)

    for s in range(Tc):                                # static unroll: Tc <= 32
        gates = pre[:, s, :] + jnp.dot(h.astype(w_hh.dtype), w_hh,
                                       preferred_element_type=jnp.float32)
        i_g = jax.nn.sigmoid(gates[:, 0 * Hp:1 * Hp])
        f_g = jax.nn.sigmoid(gates[:, 1 * Hp:2 * Hp])
        g_g = jnp.tanh(gates[:, 2 * Hp:3 * Hp])
        o_g = jax.nn.sigmoid(gates[:, 3 * Hp:4 * Hp])
        c = f_g * c + i_g * g_g
        h = o_g * jnp.tanh(c)
        e_out_ref[:, s, :] = h                         # lane-dense (Hp) store

    h_sc[...] = h
    c_sc[...] = c


@functools.partial(jax.jit,
                   static_argnames=("input_size", "hidden_size", "T", "matmul_dtype"))
def encoder_forward(input_data, params, *, input_size, hidden_size, T,
                    matmul_dtype=jnp.float32):
    """Pallas implementation of encoder.forward.

    input_data: (B, T-1, input_size) float32
    returns (input_weighted (B, T-1, input_size), input_encoded (B, T-1, hidden_size))
    """
    B = input_data.shape[0]
    Tm1 = T - 1
    N = input_size
    H = hidden_size
    Hp = _round_up(H, 128)       # lane-aligned gate slices + lane-dense hidden output

    w_attn = params["w_attn"]
    w_ih, w_hh, b_ih, b_hh = (params["w_ih"], params["w_hh"],
                              params["b_ih"], params["b_hh"])

    x = input_data.astype(jnp.float32)

    # ---- input attention, hoisted out of the recurrence.
    # Exact: score[b,n] = wa_h.h + wa_c.c + wa_x.x[b,:,n] + b; the h/c/bias terms are
    # constant over the softmax axis n and cancel, so attn is t-invariant.
    wa_x = w_attn[0, 2 * H:]                                   # (T-1,)
    attn = jax.nn.softmax(jnp.einsum("btn,t->bn", x, wa_x), axis=-1)   # (B, N)

    # ---- gate-padded LSTM parameters:
    #   gates = weighted @ w_ih_p + h @ w_hh_p + b   (each gate padded H -> Hp)
    def _pad_gate_cols(w_t):                                   # (rows, 4H) -> (rows, 4Hp)
        rows = w_t.shape[0]
        return jnp.pad(w_t.reshape(rows, 4, H),
                       ((0, 0), (0, 0), (0, Hp - H))).reshape(rows, 4 * Hp)

    w_ih_p = _pad_gate_cols(jnp.transpose(w_ih)).astype(matmul_dtype)          # (N,  4Hp)
    w_hh_p = jnp.pad(_pad_gate_cols(jnp.transpose(w_hh)),
                     ((0, Hp - H), (0, 0))).astype(matmul_dtype)               # (Hp, 4Hp)
    b_lstm = jnp.pad((b_ih + b_hh).reshape(4, H),
                     ((0, 0), (0, Hp - H))).reshape(1, 4 * Hp).astype(jnp.float32)

    Tc = _pick_time_chunk(Tm1)
    bb = _pick_batch_block(B)
    grid = (B // bb, Tm1 // Tc)

    grid_spec = pltpu.PrefetchScalarGridSpec(
        num_scalar_prefetch=0,
        grid=grid,
        in_specs=[
            pl.BlockSpec((bb, Tc, N), lambda b, t: (b, t, 0)),       # input chunk
            pl.BlockSpec((bb, N), lambda b, t: (b, 0)),              # attention weights
            pl.BlockSpec((N, 4 * Hp), lambda b, t: (0, 0)),          # input->gate weight
            pl.BlockSpec((Hp, 4 * Hp), lambda b, t: (0, 0)),         # hidden->gate weight
            pl.BlockSpec((1, 4 * Hp), lambda b, t: (0, 0)),          # fused LSTM bias
        ],
        out_specs=[
            pl.BlockSpec((bb, Tc, N), lambda b, t: (b, t, 0)),       # input_weighted
            pl.BlockSpec((bb, Tc, Hp), lambda b, t: (b, t, 0)),      # input_encoded (padded)
        ],
        scratch_shapes=[
            pltpu.VMEM((bb, Hp), jnp.float32),   # hidden-state carry
            pltpu.VMEM((bb, Hp), jnp.float32),   # cell-state carry
        ],
    )

    w_out, e_out = pl.pallas_call(
        encoder_lstm_kernel,
        out_shape=(jax.ShapeDtypeStruct((B, Tm1, N), jnp.float32),
                   jax.ShapeDtypeStruct((B, Tm1, Hp), jnp.float32)),
        grid_spec=grid_spec,
        compiler_params=pltpu.CompilerParams(
            dimension_semantics=("parallel", "arbitrary")),   # batch || , time sequential
    )(x, attn, w_ih_p, w_hh_p, b_lstm)

    # outputs already in (B, T-1, *) layout; just drop the hidden-dim padding.
    return w_out, e_out[:, :, :H]


def encoder_forward_ref(input_data, params, *, input_size, hidden_size, T):
    """Pure-JAX reference mirroring the PyTorch forward exactly (incl. the h/c concat)."""
    B = input_data.shape[0]
    H, N, Tm1 = hidden_size, input_size, T - 1
    w_attn, b_attn = params["w_attn"], params["b_attn"]
    w_ih, w_hh, b_ih, b_hh = params["w_ih"], params["w_hh"], params["b_ih"], params["b_hh"]

    h = jnp.zeros((B, H), jnp.float32)
    c = jnp.zeros((B, H), jnp.float32)
    x_perm = jnp.transpose(input_data, (0, 2, 1))   # (B, N, T-1)
    weighted_all, encoded_all = [], []
    for t in range(Tm1):
        hh = jnp.broadcast_to(h[:, None, :], (B, N, H))
        cc = jnp.broadcast_to(c[:, None, :], (B, N, H))
        cat = jnp.concatenate([hh, cc, x_perm], axis=2)            # (B, N, 2H+T-1)
        scores = cat.reshape(-1, 2 * H + Tm1) @ w_attn.T + b_attn  # (B*N, 1)
        attn = jax.nn.softmax(scores.reshape(B, N), axis=1)
        weighted = attn * input_data[:, t, :]
        gates = weighted @ w_ih.T + b_ih + h @ w_hh.T + b_hh
        i_g = jax.nn.sigmoid(gates[:, 0:H])
        f_g = jax.nn.sigmoid(gates[:, H:2 * H])
        g_g = jnp.tanh(gates[:, 2 * H:3 * H])
        o_g = jax.nn.sigmoid(gates[:, 3 * H:4 * H])
        c = f_g * c + i_g * g_g
        h = o_g * jnp.tanh(c)
        weighted_all.append(weighted)
        encoded_all.append(h)
    return jnp.stack(weighted_all, axis=1), jnp.stack(encoded_all, axis=1)


def init_params(key, input_size, hidden_size, T):
    """Deterministic synthetic parameters (shapes match nn.LSTM / nn.Linear)."""
    H, N = hidden_size, input_size
    k = 1.0 / jnp.sqrt(jnp.float32(H))
    keys = jax.random.split(key, 6)
    u = lambda kk, shape: jax.random.uniform(kk, shape, jnp.float32, -k, k)
    return {
        "w_attn": u(keys[0], (1, 2 * H + T - 1)),   # attn_linear.weight
        "b_attn": u(keys[1], (1,)),                 # attn_linear.bias
        "w_ih": u(keys[2], (4 * H, N)),             # lstm weight_ih_l0
        "w_hh": u(keys[3], (4 * H, H)),             # lstm weight_hh_l0
        "b_ih": u(keys[4], (4 * H,)),               # lstm bias_ih_l0
        "b_hh": u(keys[5], (4 * H,)),               # lstm bias_hh_l0
    }


if __name__ == "__main__":
    B, input_size, hidden_size, T = 2, 4, 32, 9   # T-1 = 8 time steps
    key = jax.random.PRNGKey(0)
    k_data, k_param = jax.random.split(key)
    input_data = jax.random.normal(k_data, (B, T - 1, input_size), jnp.float32)
    params = init_params(k_param, input_size, hidden_size, T)

    iw, ie = encoder_forward(input_data, params,
                             input_size=input_size, hidden_size=hidden_size, T=T)
    jax.block_until_ready((iw, ie))

    iw_ref, ie_ref = encoder_forward_ref(input_data, params,
                                         input_size=input_size,
                                         hidden_size=hidden_size, T=T)
    assert iw.shape == (B, T - 1, input_size) and ie.shape == (B, T - 1, hidden_size)
    assert jnp.allclose(iw, iw_ref, atol=1e-3, rtol=1e-3)
    assert jnp.allclose(ie, ie_ref, atol=1e-3, rtol=1e-3)
    print("KERNEL_OK")
</pallas_src>

<mosaic_0001>
module attributes {stable_mosaic.version = 11 : i64} {
  func.func @encoder_lstm_kernel(%arg0: i32, %arg1: i32, %arg2: memref<2x8x4xf32, #tpu.memory_space<vmem>>, %arg3: memref<2x4xf32, #tpu.memory_space<vmem>>, %arg4: memref<4x512xf32, #tpu.memory_space<vmem>>, %arg5: memref<128x512xf32, #tpu.memory_space<vmem>>, %arg6: memref<1x512xf32, #tpu.memory_space<vmem>>, %arg7: memref<2x8x4xf32, #tpu.memory_space<vmem>>, %arg8: memref<2x8x128xf32, #tpu.memory_space<vmem>>, %arg9: memref<2x128xf32, #tpu.memory_space<vmem>>, %arg10: memref<2x128xf32, #tpu.memory_space<vmem>>) attributes {dimension_semantics = [#tpu.dimension_semantics<parallel>, #tpu.dimension_semantics<arbitrary>], iteration_bounds = array<i64: 1, 1>, scalar_prefetch = 0 : i64, scratch_operands = 2 : i64, tpu.core_type = #tpu.core_type<tc>, window_params = [{transform_indices = @transform_0, window_bounds = array<i64: 2, 8, 4>}, {transform_indices = @transform_1, window_bounds = array<i64: 2, 4>}, {pipeline_mode = #tpu.pipeline_mode<synchronous>, transform_indices = @transform_2, window_bounds = array<i64: 4, 512>}, {pipeline_mode = #tpu.pipeline_mode<synchronous>, transform_indices = @transform_3, window_bounds = array<i64: 128, 512>}, {pipeline_mode = #tpu.pipeline_mode<synchronous>, transform_indices = @transform_4, window_bounds = array<i64: 1, 512>}, {transform_indices = @transform_5, window_bounds = array<i64: 2, 8, 4>}, {transform_indices = @transform_6, window_bounds = array<i64: 2, 8, 128>}]} {
    %c0_i32 = arith.constant 0 : i32
    %0 = arith.cmpi eq, %arg1, %c0_i32 : i32
    %1 = arith.extui %0 : i1 to i32
    %c0_i32_0 = arith.constant 0 : i32
    %2 = arith.cmpi ne, %1, %c0_i32_0 : i32
    scf.if %2 {
      %cst_71 = arith.constant 0.000000e+00 : f32
      %277 = vector.broadcast %cst_71 : f32 to vector<2x128xf32>
      %c0_72 = arith.constant 0 : index
      %c0_73 = arith.constant 0 : index
      %278 = vector.load %arg9[%c0_72, %c0_73] : memref<2x128xf32, #tpu.memory_space<vmem>>, vector<2x128xf32>
      tpu.vector_store %arg9[%c0_72, %c0_73], %277 {strides = array<i32>} : memref<2x128xf32, #tpu.memory_space<vmem>>, vector<2x128xf32>,
      %cst_74 = arith.constant 0.000000e+00 : f32
      %279 = vector.broadcast %cst_74 : f32 to vector<2x128xf32>
      %c0_75 = arith.constant 0 : index
      %c0_76 = arith.constant 0 : index
      %280 = vector.load %arg10[%c0_75, %c0_76] : memref<2x128xf32, #tpu.memory_space<vmem>>, vector<2x128xf32>
      tpu.vector_store %arg10[%c0_75, %c0_76], %279 {strides = array<i32>} : memref<2x128xf32, #tpu.memory_space<vmem>>, vector<2x128xf32>,
    } else {
    }
    %c0 = arith.constant 0 : index
    %c0_1 = arith.constant 0 : index
    %3 = vector.load %arg3[%c0, %c0_1] : memref<2x4xf32, #tpu.memory_space<vmem>>, vector<2x4xf32>
    %c0_2 = arith.constant 0 : index
    %c0_3 = arith.constant 0 : index
    %c0_4 = arith.constant 0 : index
    %4 = vector.load %arg2[%c0_2, %c0_3, %c0_4] : memref<2x8x4xf32, #tpu.memory_space<vmem>>, vector<2x8x4xf32>
    %5 = vector.shape_cast %3 : vector<2x4xf32> to vector<2x1x4xf32>
    %6 = vector.broadcast %5 : vector<2x1x4xf32> to vector<2x8x4xf32>
    %7 = arith.mulf %6, %4 : vector<2x8x4xf32>
    %c0_5 = arith.constant 0 : index
    %c0_6 = arith.constant 0 : index
    %c0_7 = arith.constant 0 : index
    %8 = vector.load %arg7[%c0_5, %c0_6, %c0_7] : memref<2x8x4xf32, #tpu.memory_space<vmem>>, vector<2x8x4xf32>
    tpu.vector_store %arg7[%c0_5, %c0_6, %c0_7], %7 {strides = array<i32>} : memref<2x8x4xf32, #tpu.memory_space<vmem>>, vector<2x8x4xf32>,
    %c0_8 = arith.constant 0 : index
    %c0_9 = arith.constant 0 : index
    %9 = vector.load %arg4[%c0_8, %c0_9] : memref<4x512xf32, #tpu.memory_space<vmem>>, vector<4x512xf32>
    %10 = vector.shape_cast %7 : vector<2x8x4xf32> to vector<16x4xf32>
    %cst = arith.constant dense<0.000000e+00> : vector<16x512xf32>
    %11 = tpu.matmul %10, %9, %cst {dimension_numbers = #tpu.dot_dimension_numbers<[1], [0], [0], [1], [0, 0, 1, 1], [], []>} : vector<16x4xf32>, vector<4x512xf32>, vector<16x512xf32> -> vector<16x512xf32>
    %c0_10 = arith.constant 0 : index
    %c0_11 = arith.constant 0 : index
    %12 = vector.load %arg6[%c0_10, %c0_11] : memref<1x512xf32, #tpu.memory_space<vmem>>, vector<1x512xf32>
    %13 = vector.broadcast %12 : vector<1x512xf32> to vector<16x512xf32>
    %14 = arith.addf %11, %13 : vector<16x512xf32>
    %15 = vector.shape_cast %14 : vector<16x512xf32> to vector<2x8x512xf32>
    %c0_12 = arith.constant 0 : index
    %c0_13 = arith.constant 0 : index
    %16 = vector.load %arg5[%c0_12, %c0_13] : memref<128x512xf32, #tpu.memory_space<vmem>>, vector<128x512xf32>
    %c0_14 = arith.constant 0 : index
    %c0_15 = arith.constant 0 : index
    %17 = vector.load %arg9[%c0_14, %c0_15] : memref<2x128xf32, #tpu.memory_space<vmem>>, vector<2x128xf32>
    %c0_16 = arith.constant 0 : index
    %c0_17 = arith.constant 0 : index
    %18 = vector.load %arg10[%c0_16, %c0_17] : memref<2x128xf32, #tpu.memory_space<vmem>>, vector<2x128xf32>
    %19 = vector.extract_strided_slice %15 {offsets = [0, 0, 0], sizes = [2, 1, 512], strides = [1, 1, 1]} : vector<2x8x512xf32> to vector<2x1x512xf32>
    %20 = vector.shape_cast %19 : vector<2x1x512xf32> to vector<2x512xf32>
    %cst_18 = arith.constant dense<0.000000e+00> : vector<2x512xf32>
    %21 = tpu.matmul %17, %16, %cst_18 {dimension_numbers = #tpu.dot_dimension_numbers<[1], [0], [0], [1], [0, 0, 1, 1], [], []>} : vector<2x128xf32>, vector<128x512xf32>, vector<2x512xf32> -> vector<2x512xf32>
    %22 = arith.addf %20, %21 : vector<2x512xf32>
    %23 = vector.extract_strided_slice %22 {offsets = [0, 0], sizes = [2, 128], strides = [1, 1]} : vector<2x512xf32> to vector<2x128xf32>
    %24 = arith.negf %23 : vector<2x128xf32>
    %25 = math.exp %24 : vector<2x128xf32>
    %cst_19 = arith.constant 1.000000e+00 : f32
    %26 = vector.broadcast %cst_19 : f32 to vector<2x128xf32>
    %27 = arith.addf %26, %25 : vector<2x128xf32>
    %28 = arith.divf %26, %27 : vector<2x128xf32>
    %29 = vector.extract_strided_slice %22 {offsets = [0, 128], sizes = [2, 128], strides = [1, 1]} : vector<2x512xf32> to vector<2x128xf32>
    %30 = arith.negf %29 : vector<2x128xf32>
    %31 = math.exp %30 : vector<2x128xf32>
    %cst_20 = arith.constant 1.000000e+00 : f32
    %32 = vector.broadcast %cst_20 : f32 to vector<2x128xf32>
    %33 = arith.addf %32, %31 : vector<2x128xf32>
    %34 = arith.divf %32, %33 : vector<2x128xf32>
    %35 = vector.extract_strided_slice %22 {offsets = [0, 256], sizes = [2, 128], strides = [1, 1]} : vector<2x512xf32> to vector<2x128xf32>
    %36 = math.tanh %35 : vector<2x128xf32>
    %37 = vector.extract_strided_slice %22 {offsets = [0, 384], sizes = [2, 128], strides = [1, 1]} : vector<2x512xf32> to vector<2x128xf32>
    %38 = arith.negf %37 : vector<2x128xf32>
    %39 = math.exp %38 : vector<2x128xf32>
    %cst_21 = arith.constant 1.000000e+00 : f32
    %40 = vector.broadcast %cst_21 : f32 to vector<2x128xf32>
    %41 = arith.addf %40, %39 : vector<2x128xf32>
    %42 = arith.divf %40, %41 : vector<2x128xf32>
    %43 = arith.mulf %34, %18 : vector<2x128xf32>
    %44 = arith.mulf %28, %36 : vector<2x128xf32>
    %45 = arith.addf %43, %44 : vector<2x128xf32>
    %46 = math.tanh %45 : vector<2x128xf32>
    %47 = arith.mulf %42, %46 : vector<2x128xf32>
    %c0_22 = arith.constant 0 : index
    %c0_23 = arith.constant 0 : index
    %c0_24 = arith.constant 0 : index
    %48 = vector.load %arg8[%c0_22, %c0_23, %c0_24] : memref<2x8x128xf32, #tpu.memory_space<vmem>>, vector<2x1x128xf32>
    %49 = vector.shape_cast %48 : vector<2x1x128xf32> to vector<2x128xf32>
    %50 = vector.shape_cast %47 : vector<2x128xf32> to vector<2x1x128xf32>
    tpu.vector_store %arg8[%c0_22, %c0_23, %c0_24], %50 {strides = array<i32>} : memref<2x8x128xf32, #tpu.memory_space<vmem>>, vector<2x1x128xf32>,
    %51 = vector.extract_strided_slice %15 {offsets = [0, 1, 0], sizes = [2, 1, 512], strides = [1, 1, 1]} : vector<2x8x512xf32> to vector<2x1x512xf32>
    %52 = vector.shape_cast %51 : vector<2x1x512xf32> to vector<2x512xf32>
    %cst_25 = arith.constant dense<0.000000e+00> : vector<2x512xf32>
    %53 = tpu.matmul %47, %16, %cst_25 {dimension_numbers = #tpu.dot_dimension_numbers<[1], [0], [0], [1], [0, 0, 1, 1], [], []>} : vector<2x128xf32>, vector<128x512xf32>, vector<2x512xf32> -> vector<2x512xf32>
    %54 = arith.addf %52, %53 : vector<2x512xf32>
    %55 = vector.extract_strided_slice %54 {offsets = [0, 0], sizes = [2, 128], strides = [1, 1]} : vector<2x512xf32> to vector<2x128xf32>
    %56 = arith.negf %55 : vector<2x128xf32>
    %57 = math.exp %56 : vector<2x128xf32>
    %cst_26 = arith.constant 1.000000e+00 : f32
    %58 = vector.broadcast %cst_26 : f32 to vector<2x128xf32>
    %59 = arith.addf %58, %57 : vector<2x128xf32>
    %60 = arith.divf %58, %59 : vector<2x128xf32>
    %61 = vector.extract_strided_slice %54 {offsets = [0, 128], sizes = [2, 128], strides = [1, 1]} : vector<2x512xf32> to vector<2x128xf32>
    %62 = arith.negf %61 : vector<2x128xf32>
    %63 = math.exp %62 : vector<2x128xf32>
    %cst_27 = arith.constant 1.000000e+00 : f32
    %64 = vector.broadcast %cst_27 : f32 to vector<2x128xf32>
    %65 = arith.addf %64, %63 : vector<2x128xf32>
    %66 = arith.divf %64, %65 : vector<2x128xf32>
    %67 = vector.extract_strided_slice %54 {offsets = [0, 256], sizes = [2, 128], strides = [1, 1]} : vector<2x512xf32> to vector<2x128xf32>
    %68 = math.tanh %67 : vector<2x128xf32>
    %69 = vector.extract_strided_slice %54 {offsets = [0, 384], sizes = [2, 128], strides = [1, 1]} : vector<2x512xf32> to vector<2x128xf32>
    %70 = arith.negf %69 : vector<2x128xf32>
    %71 = math.exp %70 : vector<2x128xf32>
    %cst_28 = arith.constant 1.000000e+00 : f32
    %72 = vector.broadcast %cst_28 : f32 to vector<2x128xf32>
    %73 = arith.addf %72, %71 : vector<2x128xf32>
    %74 = arith.divf %72, %73 : vector<2x128xf32>
    %75 = arith.mulf %66, %45 : vector<2x128xf32>
    %76 = arith.mulf %60, %68 : vector<2x128xf32>
    %77 = arith.addf %75, %76 : vector<2x128xf32>
    %78 = math.tanh %77 : vector<2x128xf32>
    %79 = arith.mulf %74, %78 : vector<2x128xf32>
    %c0_29 = arith.constant 0 : index
    %c1 = arith.constant 1 : index
    %c0_30 = arith.constant 0 : index
    %80 = vector.load %arg8[%c0_29, %c1, %c0_30] : memref<2x8x128xf32, #tpu.memory_space<vmem>>, vector<2x1x128xf32>
    %81 = vector.shape_cast %80 : vector<2x1x128xf32> to vector<2x128xf32>
    %82 = vector.shape_cast %79 : vector<2x128xf32> to vector<2x1x128xf32>
    tpu.vector_store %arg8[%c0_29, %c1, %c0_30], %82 {strides = array<i32>} : memref<2x8x128xf32, #tpu.memory_space<vmem>>, vector<2x1x128xf32>,
    %83 = vector.extract_strided_slice %15 {offsets = [0, 2, 0], sizes = [2, 1, 512], strides = [1, 1, 1]} : vector<2x8x512xf32> to vector<2x1x512xf32>
    %84 = vector.shape_cast %83 : vector<2x1x512xf32> to vector<2x512xf32>
    %cst_31 = arith.constant dense<0.000000e+00> : vector<2x512xf32>
    %85 = tpu.matmul %79, %16, %cst_31 {dimension_numbers = #tpu.dot_dimension_numbers<[1], [0], [0], [1], [0, 0, 1, 1], [], []>} : vector<2x128xf32>, vector<128x512xf32>, vector<2x512xf32> -> vector<2x512xf32>
    %86 = arith.addf %84, %85 : vector<2x512xf32>
    %87 = vector.extract_strided_slice %86 {offsets = [0, 0], sizes = [2, 128], strides = [1, 1]} : vector<2x512xf32> to vector<2x128xf32>
    %88 = arith.negf %87 : vector<2x128xf32>
    %89 = math.exp %88 : vector<2x128xf32>
    %cst_32 = arith.constant 1.000000e+00 : f32
    %90 = vector.broadcast %cst_32 : f32 to vector<2x128xf32>
    %91 = arith.addf %90, %89 : vector<2x128xf32>
    %92 = arith.divf %90, %91 : vector<2x128xf32>
    %93 = vector.extract_strided_slice %86 {offsets = [0, 128], sizes = [2, 128], strides = [1, 1]} : vector<2x512xf32> to vector<2x128xf32>
    %94 = arith.negf %93 : vector<2x128xf32>
    %95 = math.exp %94 : vector<2x128xf32>
    %cst_33 = arith.constant 1.000000e+00 : f32
    %96 = vector.broadcast %cst_33 : f32 to vector<2x128xf32>
    %97 = arith.addf %96, %95 : vector<2x128xf32>
    %98 = arith.divf %96, %97 : vector<2x128xf32>
    %99 = vector.extract_strided_slice %86 {offsets = [0, 256], sizes = [2, 128], strides = [1, 1]} : vector<2x512xf32> to vector<2x128xf32>
    %100 = math.tanh %99 : vector<2x128xf32>
    %101 = vector.extract_strided_slice %86 {offsets = [0, 384], sizes = [2, 128], strides = [1, 1]} : vector<2x512xf32> to vector<2x128xf32>
    %102 = arith.negf %101 : vector<2x128xf32>
    %103 = math.exp %102 : vector<2x128xf32>
    %cst_34 = arith.constant 1.000000e+00 : f32
    %104 = vector.broadcast %cst_34 : f32 to vector<2x128xf32>
    %105 = arith.addf %104, %103 : vector<2x128xf32>
    %106 = arith.divf %104, %105 : vector<2x128xf32>
    %107 = arith.mulf %98, %77 : vector<2x128xf32>
    %108 = arith.mulf %92, %100 : vector<2x128xf32>
    %109 = arith.addf %107, %108 : vector<2x128xf32>
    %110 = math.tanh %109 : vector<2x128xf32>
    %111 = arith.mulf %106, %110 : vector<2x128xf32>
    %c0_35 = arith.constant 0 : index
    %c2 = arith.constant 2 : index
    %c0_36 = arith.constant 0 : index
    %112 = vector.load %arg8[%c0_35, %c2, %c0_36] : memref<2x8x128xf32, #tpu.memory_space<vmem>>, vector<2x1x128xf32>
    %113 = vector.shape_cast %112 : vector<2x1x128xf32> to vector<2x128xf32>
    %114 = vector.shape_cast %111 : vector<2x128xf32> to vector<2x1x128xf32>
    tpu.vector_store %arg8[%c0_35, %c2, %c0_36], %114 {strides = array<i32>} : memref<2x8x128xf32, #tpu.memory_space<vmem>>, vector<2x1x128xf32>,
    %115 = vector.extract_strided_slice %15 {offsets = [0, 3, 0], sizes = [2, 1, 512], strides = [1, 1, 1]} : vector<2x8x512xf32> to vector<2x1x512xf32>
    %116 = vector.shape_cast %115 : vector<2x1x512xf32> to vector<2x512xf32>
    %cst_37 = arith.constant dense<0.000000e+00> : vector<2x512xf32>
    %117 = tpu.matmul %111, %16, %cst_37 {dimension_numbers = #tpu.dot_dimension_numbers<[1], [0], [0], [1], [0, 0, 1, 1], [], []>} : vector<2x128xf32>, vector<128x512xf32>, vector<2x512xf32> -> vector<2x512xf32>
    %118 = arith.addf %116, %117 : vector<2x512xf32>
    %119 = vector.extract_strided_slice %118 {offsets = [0, 0], sizes = [2, 128], strides = [1, 1]} : vector<2x512xf32> to vector<2x128xf32>
    %120 = arith.negf %119 : vector<2x128xf32>
    %121 = math.exp %120 : vector<2x128xf32>
    %cst_38 = arith.constant 1.000000e+00 : f32
    %122 = vector.broadcast %cst_38 : f32 to vector<2x128xf32>
    %123 = arith.addf %122, %121 : vector<2x128xf32>
    %124 = arith.divf %122, %123 : vector<2x128xf32>
    %125 = vector.extract_strided_slice %118 {offsets = [0, 128], sizes = [2, 128], strides = [1, 1]} : vector<2x512xf32> to vector<2x128xf32>
    %126 = arith.negf %125 : vector<2x128xf32>
    %127 = math.exp %126 : vector<2x128xf32>
    %cst_39 = arith.constant 1.000000e+00 : f32
    %128 = vector.broadcast %cst_39 : f32 to vector<2x128xf32>
    %129 = arith.addf %128, %127 : vector<2x128xf32>
    %130 = arith.divf %128, %129 : vector<2x128xf32>
    %131 = vector.extract_strided_slice %118 {offsets = [0, 256], sizes = [2, 128], strides = [1, 1]} : vector<2x512xf32> to vector<2x128xf32>
    %132 = math.tanh %131 : vector<2x128xf32>
    %133 = vector.extract_strided_slice %118 {offsets = [0, 384], sizes = [2, 128], strides = [1, 1]} : vector<2x512xf32> to vector<2x128xf32>
    %134 = arith.negf %133 : vector<2x128xf32>
    %135 = math.exp %134 : vector<2x128xf32>
    %cst_40 = arith.constant 1.000000e+00 : f32
    %136 = vector.broadcast %cst_40 : f32 to vector<2x128xf32>
    %137 = arith.addf %136, %135 : vector<2x128xf32>
    %138 = arith.divf %136, %137 : vector<2x128xf32>
    %139 = arith.mulf %130, %109 : vector<2x128xf32>
    %140 = arith.mulf %124, %132 : vector<2x128xf32>
    %141 = arith.addf %139, %140 : vector<2x128xf32>
    %142 = math.tanh %141 : vector<2x128xf32>
    %143 = arith.mulf %138, %142 : vector<2x128xf32>
    %c0_41 = arith.constant 0 : index
    %c3 = arith.constant 3 : index
    %c0_42 = arith.constant 0 : index
    %144 = vector.load %arg8[%c0_41, %c3, %c0_42] : memref<2x8x128xf32, #tpu.memory_space<vmem>>, vector<2x1x128xf32>
    %145 = vector.shape_cast %144 : vector<2x1x128xf32> to vector<2x128xf32>
    %146 = vector.shape_cast %143 : vector<2x128xf32> to vector<2x1x128xf32>
    tpu.vector_store %arg8[%c0_41, %c3, %c0_42], %146 {strides = array<i32>} : memref<2x8x128xf32, #tpu.memory_space<vmem>>, vector<2x1x128xf32>,
    %147 = vector.extract_strided_slice %15 {offsets = [0, 4, 0], sizes = [2, 1, 512], strides = [1, 1, 1]} : vector<2x8x512xf32> to vector<2x1x512xf32>
    %148 = vector.shape_cast %147 : vector<2x1x512xf32> to vector<2x512xf32>
    %cst_43 = arith.constant dense<0.000000e+00> : vector<2x512xf32>
    %149 = tpu.matmul %143, %16, %cst_43 {dimension_numbers = #tpu.dot_dimension_numbers<[1], [0], [0], [1], [0, 0, 1, 1], [], []>} : vector<2x128xf32>, vector<128x512xf32>, vector<2x512xf32> -> vector<2x512xf32>
    %150 = arith.addf %148, %149 : vector<2x512xf32>
    %151 = vector.extract_strided_slice %150 {offsets = [0, 0], sizes = [2, 128], strides = [1, 1]} : vector<2x512xf32> to vector<2x128xf32>
    %152 = arith.negf %151 : vector<2x128xf32>
    %153 = math.exp %152 : vector<2x128xf32>
    %cst_44 = arith.constant 1.000000e+00 : f32
    %154 = vector.broadcast %cst_44 : f32 to vector<2x128xf32>
    %155 = arith.addf %154, %153 : vector<2x128xf32>
    %156 = arith.divf %154, %155 : vector<2x128xf32>
    %157 = vector.extract_strided_slice %150 {offsets = [0, 128], sizes = [2, 128], strides = [1, 1]} : vector<2x512xf32> to vector<2x128xf32>
    %158 = arith.negf %157 : vector<2x128xf32>
    %159 = math.exp %158 : vector<2x128xf32>
    %cst_45 = arith.constant 1.000000e+00 : f32
    %160 = vector.broadcast %cst_45 : f32 to vector<2x128xf32>
    %161 = arith.addf %160, %159 : vector<2x128xf32>
    %162 = arith.divf %160, %161 : vector<2x128xf32>
    %163 = vector.extract_strided_slice %150 {offsets = [0, 256], sizes = [2, 128], strides = [1, 1]} : vector<2x512xf32> to vector<2x128xf32>
    %164 = math.tanh %163 : vector<2x128xf32>
    %165 = vector.extract_strided_slice %150 {offsets = [0, 384], sizes = [2, 128], strides = [1, 1]} : vector<2x512xf32> to vector<2x128xf32>
    %166 = arith.negf %165 : vector<2x128xf32>
    %167 = math.exp %166 : vector<2x128xf32>
    %cst_46 = arith.constant 1.000000e+00 : f32
    %168 = vector.broadcast %cst_46 : f32 to vector<2x128xf32>
    %169 = arith.addf %168, %167 : vector<2x128xf32>
    %170 = arith.divf %168, %169 : vector<2x128xf32>
    %171 = arith.mulf %162, %141 : vector<2x128xf32>
    %172 = arith.mulf %156, %164 : vector<2x128xf32>
    %173 = arith.addf %171, %172 : vector<2x128xf32>
    %174 = math.tanh %173 : vector<2x128xf32>
    %175 = arith.mulf %170, %174 : vector<2x128xf32>
    %c0_47 = arith.constant 0 : index
    %c4 = arith.constant 4 : index
    %c0_48 = arith.constant 0 : index
    %176 = vector.load %arg8[%c0_47, %c4, %c0_48] : memref<2x8x128xf32, #tpu.memory_space<vmem>>, vector<2x1x128xf32>
    %177 = vector.shape_cast %176 : vector<2x1x128xf32> to vector<2x128xf32>
    %178 = vector.shape_cast %175 : vector<2x128xf32> to vector<2x1x128xf32>
    tpu.vector_store %arg8[%c0_47, %c4, %c0_48], %178 {strides = array<i32>} : memref<2x8x128xf32, #tpu.memory_space<vmem>>, vector<2x1x128xf32>,
    %179 = vector.extract_strided_slice %15 {offsets = [0, 5, 0], sizes = [2, 1, 512], strides = [1, 1, 1]} : vector<2x8x512xf32> to vector<2x1x512xf32>
    %180 = vector.shape_cast %179 : vector<2x1x512xf32> to vector<2x512xf32>
    %cst_49 = arith.constant dense<0.000000e+00> : vector<2x512xf32>
    %181 = tpu.matmul %175, %16, %cst_49 {dimension_numbers = #tpu.dot_dimension_numbers<[1], [0], [0], [1], [0, 0, 1, 1], [], []>} : vector<2x128xf32>, vector<128x512xf32>, vector<2x512xf32> -> vector<2x512xf32>
    %182 = arith.addf %180, %181 : vector<2x512xf32>
    %183 = vector.extract_strided_slice %182 {offsets = [0, 0], sizes = [2, 128], strides = [1, 1]} : vector<2x512xf32> to vector<2x128xf32>
    %184 = arith.negf %183 : vector<2x128xf32>
    %185 = math.exp %184 : vector<2x128xf32>
    %cst_50 = arith.constant 1.000000e+00 : f32
    %186 = vector.broadcast %cst_50 : f32 to vector<2x128xf32>
    %187 = arith.addf %186, %185 : vector<2x128xf32>
    %188 = arith.divf %186, %187 : vector<2x128xf32>
    %189 = vector.extract_strided_slice %182 {offsets = [0, 128], sizes = [2, 128], strides = [1, 1]} : vector<2x512xf32> to vector<2x128xf32>
    %190 = arith.negf %189 : vector<2x128xf32>
    %191 = math.exp %190 : vector<2x128xf32>
    %cst_51 = arith.constant 1.000000e+00 : f32
    %192 = vector.broadcast %cst_51 : f32 to vector<2x128xf32>
    %193 = arith.addf %192, %191 : vector<2x128xf32>
    %194 = arith.divf %192, %193 : vector<2x128xf32>
    %195 = vector.extract_strided_slice %182 {offsets = [0, 256], sizes = [2, 128], strides = [1, 1]} : vector<2x512xf32> to vector<2x128xf32>
    %196 = math.tanh %195 : vector<2x128xf32>
    %197 = vector.extract_strided_slice %182 {offsets = [0, 384], sizes = [2, 128], strides = [1, 1]} : vector<2x512xf32> to vector<2x128xf32>
    %198 = arith.negf %197 : vector<2x128xf32>
    %199 = math.exp %198 : vector<2x128xf32>
    %cst_52 = arith.constant 1.000000e+00 : f32
    %200 = vector.broadcast %cst_52 : f32 to vector<2x128xf32>
    %201 = arith.addf %200, %199 : vector<2x128xf32>
    %202 = arith.divf %200, %201 : vector<2x128xf32>
    %203 = arith.mulf %194, %173 : vector<2x128xf32>
    %204 = arith.mulf %188, %196 : vector<2x128xf32>
    %205 = arith.addf %203, %204 : vector<2x128xf32>
    %206 = math.tanh %205 : vector<2x128xf32>
    %207 = arith.mulf %202, %206 : vector<2x128xf32>
    %c0_53 = arith.constant 0 : index
    %c5 = arith.constant 5 : index
    %c0_54 = arith.constant 0 : index
    %208 = vector.load %arg8[%c0_53, %c5, %c0_54] : memref<2x8x128xf32, #tpu.memory_space<vmem>>, vector<2x1x128xf32>
    %209 = vector.shape_cast %208 : vector<2x1x128xf32> to vector<2x128xf32>
    %210 = vector.shape_cast %207 : vector<2x128xf32> to vector<2x1x128xf32>
    tpu.vector_store %arg8[%c0_53, %c5, %c0_54], %210 {strides = array<i32>} : memref<2x8x128xf32, #tpu.memory_space<vmem>>, vector<2x1x128xf32>,
    %211 = vector.extract_strided_slice %15 {offsets = [0, 6, 0], sizes = [2, 1, 512], strides = [1, 1, 1]} : vector<2x8x512xf32> to vector<2x1x512xf32>
    %212 = vector.shape_cast %211 : vector<2x1x512xf32> to vector<2x512xf32>
    %cst_55 = arith.constant dense<0.000000e+00> : vector<2x512xf32>
    %213 = tpu.matmul %207, %16, %cst_55 {dimension_numbers = #tpu.dot_dimension_numbers<[1], [0], [0], [1], [0, 0, 1, 1], [], []>} : vector<2x128xf32>, vector<128x512xf32>, vector<2x512xf32> -> vector<2x512xf32>
    %214 = arith.addf %212, %213 : vector<2x512xf32>
    %215 = vector.extract_strided_slice %214 {offsets = [0, 0], sizes = [2, 128], strides = [1, 1]} : vector<2x512xf32> to vector<2x128xf32>
    %216 = arith.negf %215 : vector<2x128xf32>
    %217 = math.exp %216 : vector<2x128xf32>
    %cst_56 = arith.constant 1.000000e+00 : f32
    %218 = vector.broadcast %cst_56 : f32 to vector<2x128xf32>
    %219 = arith.addf %218, %217 : vector<2x128xf32>
    %220 = arith.divf %218, %219 : vector<2x128xf32>
    %221 = vector.extract_strided_slice %214 {offsets = [0, 128], sizes = [2, 128], strides = [1, 1]} : vector<2x512xf32> to vector<2x128xf32>
    %222 = arith.negf %221 : vector<2x128xf32>
    %223 = math.exp %222 : vector<2x128xf32>
    %cst_57 = arith.constant 1.000000e+00 : f32
    %224 = vector.broadcast %cst_57 : f32 to vector<2x128xf32>
    %225 = arith.addf %224, %223 : vector<2x128xf32>
    %226 = arith.divf %224, %225 : vector<2x128xf32>
    %227 = vector.extract_strided_slice %214 {offsets = [0, 256], sizes = [2, 128], strides = [1, 1]} : vector<2x512xf32> to vector<2x128xf32>
    %228 = math.tanh %227 : vector<2x128xf32>
    %229 = vector.extract_strided_slice %214 {offsets = [0, 384], sizes = [2, 128], strides = [1, 1]} : vector<2x512xf32> to vector<2x128xf32>
    %230 = arith.negf %229 : vector<2x128xf32>
    %231 = math.exp %230 : vector<2x128xf32>
    %cst_58 = arith.constant 1.000000e+00 : f32
    %232 = vector.broadcast %cst_58 : f32 to vector<2x128xf32>
    %233 = arith.addf %232, %231 : vector<2x128xf32>
    %234 = arith.divf %232, %233 : vector<2x128xf32>
    %235 = arith.mulf %226, %205 : vector<2x128xf32>
    %236 = arith.mulf %220, %228 : vector<2x128xf32>
    %237 = arith.addf %235, %236 : vector<2x128xf32>
    %238 = math.tanh %237 : vector<2x128xf32>
    %239 = arith.mulf %234, %238 : vector<2x128xf32>
    %c0_59 = arith.constant 0 : index
    %c6 = arith.constant 6 : index
    %c0_60 = arith.constant 0 : index
    %240 = vector.load %arg8[%c0_59, %c6, %c0_60] : memref<2x8x128xf32, #tpu.memory_space<vmem>>, vector<2x1x128xf32>
    %241 = vector.shape_cast %240 : vector<2x1x128xf32> to vector<2x128xf32>
    %242 = vector.shape_cast %239 : vector<2x128xf32> to vector<2x1x128xf32>
    tpu.vector_store %arg8[%c0_59, %c6, %c0_60], %242 {strides = array<i32>} : memref<2x8x128xf32, #tpu.memory_space<vmem>>, vector<2x1x128xf32>,
    %243 = vector.extract_strided_slice %15 {offsets = [0, 7, 0], sizes = [2, 1, 512], strides = [1, 1, 1]} : vector<2x8x512xf32> to vector<2x1x512xf32>
    %244 = vector.shape_cast %243 : vector<2x1x512xf32> to vector<2x512xf32>
    %cst_61 = arith.constant dense<0.000000e+00> : vector<2x512xf32>
    %245 = tpu.matmul %239, %16, %cst_61 {dimension_numbers = #tpu.dot_dimension_numbers<[1], [0], [0], [1], [0, 0, 1, 1], [], []>} : vector<2x128xf32>, vector<128x512xf32>, vector<2x512xf32> -> vector<2x512xf32>
    %246 = arith.addf %244, %245 : vector<2x512xf32>
    %247 = vector.extract_strided_slice %246 {offsets = [0, 0], sizes = [2, 128], strides = [1, 1]} : vector<2x512xf32> to vector<2x128xf32>
    %248 = arith.negf %247 : vector<2x128xf32>
    %249 = math.exp %248 : vector<2x128xf32>
    %cst_62 = arith.constant 1.000000e+00 : f32
    %250 = vector.broadcast %cst_62 : f32 to vector<2x128xf32>
    %251 = arith.addf %250, %249 : vector<2x128xf32>
    %252 = arith.divf %250, %251 : vector<2x128xf32>
    %253 = vector.extract_strided_slice %246 {offsets = [0, 128], sizes = [2, 128], strides = [1, 1]} : vector<2x512xf32> to vector<2x128xf32>
    %254 = arith.negf %253 : vector<2x128xf32>
    %255 = math.exp %254 : vector<2x128xf32>
    %cst_63 = arith.constant 1.000000e+00 : f32
    %256 = vector.broadcast %cst_63 : f32 to vector<2x128xf32>
    %257 = arith.addf %256, %255 : vector<2x128xf32>
    %258 = arith.divf %256, %257 : vector<2x128xf32>
    %259 = vector.extract_strided_slice %246 {offsets = [0, 256], sizes = [2, 128], strides = [1, 1]} : vector<2x512xf32> to vector<2x128xf32>
    %260 = math.tanh %259 : vector<2x128xf32>
    %261 = vector.extract_strided_slice %246 {offsets = [0, 384], sizes = [2, 128], strides = [1, 1]} : vector<2x512xf32> to vector<2x128xf32>
    %262 = arith.negf %261 : vector<2x128xf32>
    %263 = math.exp %262 : vector<2x128xf32>
    %cst_64 = arith.constant 1.000000e+00 : f32
    %264 = vector.broadcast %cst_64 : f32 to vector<2x128xf32>
    %265 = arith.addf %264, %263 : vector<2x128xf32>
    %266 = arith.divf %264, %265 : vector<2x128xf32>
    %267 = arith.mulf %258, %237 : vector<2x128xf32>
    %268 = arith.mulf %252, %260 : vector<2x128xf32>
    %269 = arith.addf %267, %268 : vector<2x128xf32>
    %270 = math.tanh %269 : vector<2x128xf32>
    %271 = arith.mulf %266, %270 : vector<2x128xf32>
    %c0_65 = arith.constant 0 : index
    %c7 = arith.constant 7 : index
    %c0_66 = arith.constant 0 : index
    %272 = vector.load %arg8[%c0_65, %c7, %c0_66] : memref<2x8x128xf32, #tpu.memory_space<vmem>>, vector<2x1x128xf32>
    %273 = vector.shape_cast %272 : vector<2x1x128xf32> to vector<2x128xf32>
    %274 = vector.shape_cast %271 : vector<2x128xf32> to vector<2x1x128xf32>
    tpu.vector_store %arg8[%c0_65, %c7, %c0_66], %274 {strides = array<i32>} : memref<2x8x128xf32, #tpu.memory_space<vmem>>, vector<2x1x128xf32>,
    %c0_67 = arith.constant 0 : index
    %c0_68 = arith.constant 0 : index
    %275 = vector.load %arg9[%c0_67, %c0_68] : memref<2x128xf32, #tpu.memory_space<vmem>>, vector<2x128xf32>
    tpu.vector_store %arg9[%c0_67, %c0_68], %271 {strides = array<i32>} : memref<2x128xf32, #tpu.memory_space<vmem>>, vector<2x128xf32>,
    %c0_69 = arith.constant 0 : index
    %c0_70 = arith.constant 0 : index
    %276 = vector.load %arg10[%c0_69, %c0_70] : memref<2x128xf32, #tpu.memory_space<vmem>>, vector<2x128xf32>
    tpu.vector_store %arg10[%c0_69, %c0_70], %269 {strides = array<i32>} : memref<2x128xf32, #tpu.memory_space<vmem>>, vector<2x128xf32>,
    return
  }
  func.func @transform_0(%arg0: i32, %arg1: i32) -> (i32, i32, i32) {
    %c0_i32 = arith.constant 0 : i32
    %c0_i32_0 = arith.constant 0 : i32
    return %arg0, %arg1, %c0_i32 : i32, i32, i32
  }
  func.func @transform_1(%arg0: i32, %arg1: i32) -> (i32, i32) {
    %c0_i32 = arith.constant 0 : i32
    %c0_i32_0 = arith.constant 0 : i32
    return %arg0, %c0_i32 : i32, i32
  }
  func.func @transform_2(%arg0: i32, %arg1: i32) -> (i32, i32) {
    %c0_i32 = arith.constant 0 : i32
    %c0_i32_0 = arith.constant 0 : i32
    %c0_i32_1 = arith.constant 0 : i32
    return %c0_i32, %c0_i32_0 : i32, i32
  }
  func.func @transform_3(%arg0: i32, %arg1: i32) -> (i32, i32) {
    %c0_i32 = arith.constant 0 : i32
    %c0_i32_0 = arith.constant 0 : i32
    %c0_i32_1 = arith.constant 0 : i32
    return %c0_i32, %c0_i32_0 : i32, i32
  }
  func.func @transform_4(%arg0: i32, %arg1: i32) -> (i32, i32) {
    %c0_i32 = arith.constant 0 : i32
    %c0_i32_0 = arith.constant 0 : i32
    %c0_i32_1 = arith.constant 0 : i32
    return %c0_i32, %c0_i32_0 : i32, i32
  }
  func.func @transform_5(%arg0: i32, %arg1: i32) -> (i32, i32, i32) {
    %c0_i32 = arith.constant 0 : i32
    %c0_i32_0 = arith.constant 0 : i32
    return %arg0, %arg1, %c0_i32 : i32, i32, i32
  }
  func.func @transform_6(%arg0: i32, %arg1: i32) -> (i32, i32, i32) {
    %c0_i32 = arith.constant 0 : i32
    %c0_i32_0 = arith.constant 0 : i32
    return %arg0, %arg1, %c0_i32 : i32, i32, i32
  }
}

</mosaic_0001>

<llo_original>
// kernel: encoder_forward.1
$region0: #{encoder_forward.1}
  #allocation0 [shape = 'u32[]', space=smem, size = 0x4, offset = 0x4, fixed_abs, tag = 'smem constant byte address 0x4 - core index']
  #allocation1 [shape = 'u32[144,128]{1,0:T(1,128)}', space=vmem, size = 0x12000, scoped, tag = 'internal scratch']
  #allocation2 [shape = 'f32[2,128]{1,0:T(2,128)}', space=vmem, size = 0x400, scoped, tag = 'scratch operand']
  #allocation3 [shape = 'f32[2,128]{1,0:T(2,128)}', space=vmem, size = 0x400, scoped, tag = 'scratch operand']
  %s0 = inlined_call_operand.vmem [shape: f32[2,8,4], index: 0, kind: input, shape index: {}]
  %s1 = inlined_call_operand.vmem [shape: f32[2,4], index: 1, kind: input, shape index: {}]
  %s2 = inlined_call_operand.vmem [shape: f32[4,512], index: 2, kind: input, shape index: {}]
  %s3 = inlined_call_operand.vmem [shape: f32[128,512], index: 3, kind: input, shape index: {}]
  %s4 = inlined_call_operand.vmem [shape: f32[1,512], index: 4, kind: input, shape index: {}]
  %s5 = inlined_call_operand.vmem [shape: f32[2,8,4], index: 5, kind: output, shape index: {0}]
  %s6 = inlined_call_operand.hbm [shape: f32[2,8,128], index: 6, kind: output, shape index: {1}]
  %7 = xla_tuple %s5, %s6
  %s8 = sld [smem:[#allocation0]]
  $region42: #{encoder_forward.1} parent=0
    _
  %s10 = ssub.s32 1, %s8
  %s11 = scalar_select 0, %s10, %s8
  $region1: #{encoder_forward.1} parent=0
    #allocation4 [shape = 'u8[8192]{0}', space=vmem, size = 0x2000, scoped, tag = 'output window, operand 1, single buffered']
    #allocation5 [shape = 's32[1]{0}', space=sflag, size = 0x4, scoped, tag = 'scoped memory for encoder_forward.1']
    %12 = vsyncpa [#allocation5], 0
    // Predicated region
    $region2: #{encoder_forward.1} parent=1 // pred_check
      _
    $region3: #{encoder_forward.1} parent=1 // pred_check_branch
      %14 = sbr.rel (0) target = $region5
    $region4: #{encoder_forward.1} parent=1 // pred_region
      _
    $region5: #{encoder_forward.1} parent=1 // pred_fallthru
      _
    // Predicated region
    $region6: #{encoder_forward.1} parent=1 // pred_check
      _
    $region7: #{encoder_forward.1} parent=1 // pred_check_branch
      %16 = sbr.rel (0) target = $region9
    $region8: #{encoder_forward.1} parent=1 // pred_region
      _
    $region9: #{encoder_forward.1} parent=1 // pred_fallthru
      _
    // Predicated region
    $region10: #{encoder_forward.1} parent=1 // pred_check
      _
    $region11: #{encoder_forward.1} parent=1 // pred_check_branch
      %18 = sbr.rel (0) target = $region13
    $region12: #{encoder_forward.1} parent=1 // pred_region
      _
    $region13: #{encoder_forward.1} parent=1 // pred_fallthru
      _
    // Predicated region
    $region14: #{encoder_forward.1} parent=1 // pred_check
      _
    $region15: #{encoder_forward.1} parent=1 // pred_check_branch
      %20 = sbr.rel (0) target = $region17
    $region16: #{encoder_forward.1} parent=1 // pred_region
      _
    $region17: #{encoder_forward.1} parent=1 // pred_fallthru
      _
    // Predicated region
    $region18: #{encoder_forward.1} parent=1 // pred_check
      _
    $region19: #{encoder_forward.1} parent=1 // pred_check_branch
      %22 = sbr.rel (0) target = $region21
    $region20: #{encoder_forward.1} parent=1 // pred_region
      _
    $region21: #{encoder_forward.1} parent=1 // pred_fallthru
      _
    %p23 = scmp.eq.s32.totalorder 0, 0
    // Predicated region
    $region22: #{encoder_forward.1} parent=1 // pred_check
      %p24 = pneg %p23
    $region23: #{encoder_forward.1} parent=1 // pred_check_branch
      %26 = sbr.rel (%p24) target = $region25
    $region24: #{encoder_forward.1} parent=1 // pred_region
      %27 = vst [vmem:[#allocation2] sm:$0x3] 0.0
      %28 = vst [vmem:[#allocation3] sm:$0x3] 0.0
    $region25: #{encoder_forward.1} parent=1 // pred_fallthru
      _
    %v29 = vld [vmem:[%s1] sm:$0x3]
    %v30 = vld [vmem:[%s0] sm:$0xff]
    %v31 = vld [vmem:[%s0 + $0x8] sm:$0xff]
    %v34 = vunpack.c.l.s4 1966171168
    %v35 = vunpack.c.0.s8 %v34
    %v36 = vlaneseq
    %v37 = vshrl.u32 %v36, 7
    %v38 = vsub.s32 %v35, %v37
    %v39 = vrot.slane %v29, %v38
    %v40 = vcombine.high %v39, %v39
    %v42 = vunpack.c.l.s4 1966171168
    %v43 = vunpack.c.0.s8 %v42
    %v44 = vlaneseq
    %v45 = vshrl.u32 %v44, 7
    %v46 = vsub.s32 %v43, %v45
    %v47 = vrot.slane %v39, %v46
    %v49 = vunpack.c.l.s4 1966171168
    %v50 = vunpack.c.0.s8 %v49
    %v51 = vlaneseq
    %v52 = vshrl.u32 %v51, 7
    %v53 = vsub.s32 %v50, %v52
    %v54 = vrot.slane %v40, %v53
    %v55 = vlaneseq
    %v56 = vshrl.u32 %v55, 7
    %v57 = vsub.s32 0, %v56
    %v58 = vrot.slane %v47, %v57
    %v59 = vlaneseq
    %v60 = vshrl.u32 %v59, 7
    %v61 = vsub.s32 0, %v60
    %v62 = vrot.slane %v54, %v61
    %v65 = vmul.f32 %v58, %v30
    %v66 = vmul.f32 %v62, %v31
    %vm67 = vcmask 31744
    %68 = vst.msk [vmem:[%s5] sm:$0xff] %vm67, %v65
    %69 = vst.msk [vmem:[%s5 + $0x8] sm:$0xff] %vm67, %v66
    %v70 = vld [vmem:[%s2] sm:$0xff]
    %v71 = vld [vmem:[%s2 + $0x8] sm:$0xff]
    %v72 = vld [vmem:[%s4] sm:$0xf]
    %v74 = vlaneseq
    %v75 = vshrl.u32 %v74, 7
    %v76 = vsub.s32 0, %v75
    %v77 = vrot.slane %v72, %v76
    %v78 = vlaneseq
    %v79 = vshrl.u32 %v78, 7
    %v80 = vsub.s32 1, %v79
    %v81 = vrot.slane %v72, %v80
    %v82 = vlaneseq
    %v83 = vshrl.u32 %v82, 7
    %v84 = vsub.s32 2, %v83
    %v85 = vrot.slane %v72, %v84
    %v86 = vlaneseq
    %v87 = vshrl.u32 %v86, 7
    %v88 = vsub.s32 3, %v87
    %v89 = vrot.slane %v72, %v88
    %v96 = vcombine.high %v70, %v70
    %v97 = vcombine.high %v71, %v71
    %v99 = vsel %vm67, %v65, 0
    %v102 = vsel %vm67, %v66, 0
    %vm104 = vcmask 1043456
    %v105 = vsel %vm104, %v70, 0
    %v107 = vsel %vm104, %v96, 0
    %v109 = vsel %vm104, %v71, 0
    %v111 = vsel %vm104, %v97, 0
    %113 = vmatprep.subr.mxu0 %v107
    %114 = vmatpush1.msra.mxu0 %v105
    %115 = vmatprep.subr.mxu0 0.0
    %116 = vmatpush1.msra.mxu0 0.0
    %117 = vmatprep.subr.mxu0 0.0
    %118 = vmatpush1.msra.mxu0 0.0
    %119 = vmatprep.subr.mxu0 0.0
    %120 = vmatpush1.msra.mxu0 0.0
    %121 = vmatprep.subr.mxu0 0.0
    %122 = vmatpush1.msra.mxu0 0.0
    %123 = vmatprep.subr.mxu0 0.0
    %124 = vmatpush1.msra.mxu0 0.0
    %125 = vmatprep.subr.mxu0 0.0
    %126 = vmatpush1.msra.mxu0 0.0
    %127 = vmatprep.subr.mxu0 0.0
    %128 = vmatpush1.msra.mxu0 0.0
    %129 = vmatprep.subr.mxu0 0.0
    %130 = vmatpush1.msra.mxu0 0.0
    %131 = vmatprep.subr.mxu0 0.0
    %132 = vmatpush1.msra.mxu0 0.0
    %133 = vmatprep.subr.mxu0 0.0
    %134 = vmatpush1.msra.mxu0 0.0
    %135 = vmatprep.subr.mxu0 0.0
    %136 = vmatpush1.msra.mxu0 0.0
    %137 = vmatprep.subr.mxu0 0.0
    %138 = vmatpush1.msra.mxu0 0.0
    %139 = vmatprep.subr.mxu0 0.0
    %140 = vmatpush1.msra.mxu0 0.0
    %141 = vmatprep.subr.mxu0 0.0
    %142 = vmatpush1.msra.mxu0 0.0
    %143 = vmatprep.subr.mxu0 0.0
    %144 = vmatpush1.msra.mxu0 0.0
    %145 = vmatprep.subr.mxu0 0.0
    %146 = vmatpush1.msra.mxu0 0.0
    %147 = vmatprep.subr.mxu0 0.0
    %148 = vmatpush1.msra.mxu0 0.0
    %149 = vmatprep.subr.mxu0 0.0
    %150 = vmatpush1.msra.mxu0 0.0
    %151 = vmatprep.subr.mxu0 0.0
    %152 = vmatpush1.msra.mxu0 0.0
    %153 = vmatprep.subr.mxu0 0.0
    %154 = vmatpush1.msra.mxu0 0.0
    %155 = vmatprep.subr.mxu0 0.0
    %156 = vmatpush1.msra.mxu0 0.0
    %157 = vmatprep.subr.mxu0 0.0
    %158 = vmatpush1.msra.mxu0 0.0
    %159 = vmatprep.subr.mxu0 0.0
    %160 = vmatpush1.msra.mxu0 0.0
    %161 = vmatprep.subr.mxu0 0.0
    %162 = vmatpush1.msra.mxu0 0.0
    %163 = vmatprep.subr.mxu0 0.0
    %164 = vmatpush1.msra.mxu0 0.0
    %165 = vmatprep.subr.mxu0 0.0
    %166 = vmatpush1.msra.mxu0 0.0
    %167 = vmatprep.subr.mxu0 0.0
    %168 = vmatpush1.msra.mxu0 0.0
    %169 = vmatprep.subr.mxu0 0.0
    %170 = vmatpush1.msra.mxu0 0.0
    %171 = vmatprep.subr.mxu0 0.0
    %172 = vmatpush1.msra.mxu0 0.0
    %173 = vmatprep.subr.mxu0 0.0
    %174 = vmatpush1.msra.mxu0 0.0
    %175 = vmatprep.subr.mxu0 0.0
    %176 = vmatpush1.msra.mxu0 0.0
    %177 = vmatprep.mubr.f32.mxu0 0.0
    %178 = vmatmul.mubr.f32.gmra.mrb[0].mxu0 %v99
    %v179 = vpop.f32.mrb[0].mxu0
    %v180 = vadd.f32 %v77, %v179
    %v181 = vpop.f32.mrb[0].mxu0
    %v182 = vadd.f32 %v81, %v181
    %183 = vmatprep.mubr.f32.mxu0 0.0
    %184 = vmatmul.mubr.f32.gmra.mrb[0].mxu0 %v102
    %v185 = vpop.f32.mrb[0].mxu0
    %v186 = vadd.f32 %v77, %v185
    %v187 = vpop.f32.mrb[0].mxu0
    %v188 = vadd.f32 %v81, %v187
    %189 = vdwg.mxu0
    %190 = vmatprep.subr.mxu0 %v111
    %191 = vmatpush1.msra.mxu0 %v109
    %192 = vmatprep.subr.mxu0 0.0
    %193 = vmatpush1.msra.mxu0 0.0
    %194 = vmatprep.subr.mxu0 0.0
    %195 = vmatpush1.msra.mxu0 0.0
    %196 = vmatprep.subr.mxu0 0.0
    %197 = vmatpush1.msra.mxu0 0.0
    %198 = vmatprep.subr.mxu0 0.0
    %199 = vmatpush1.msra.mxu0 0.0
    %200 = vmatprep.subr.mxu0 0.0
    %201 = vmatpush1.msra.mxu0 0.0
    %202 = vmatprep.subr.mxu0 0.0
    %203 = vmatpush1.msra.mxu0 0.0
    %204 = vmatprep.subr.mxu0 0.0
    %205 = vmatpush1.msra.mxu0 0.0
    %206 = vmatprep.subr.mxu0 0.0
    %207 = vmatpush1.msra.mxu0 0.0
    %208 = vmatprep.subr.mxu0 0.0
    %209 = vmatpush1.msra.mxu0 0.0
    %210 = vmatprep.subr.mxu0 0.0
    %211 = vmatpush1.msra.mxu0 0.0
    %212 = vmatprep.subr.mxu0 0.0
    %213 = vmatpush1.msra.mxu0 0.0
    %214 = vmatprep.subr.mxu0 0.0
    %215 = vmatpush1.msra.mxu0 0.0
    %216 = vmatprep.subr.mxu0 0.0
    %217 = vmatpush1.msra.mxu0 0.0
    %218 = vmatprep.subr.mxu0 0.0
    %219 = vmatpush1.msra.mxu0 0.0
    %220 = vmatprep.subr.mxu0 0.0
    %221 = vmatpush1.msra.mxu0 0.0
    %222 = vmatprep.subr.mxu0 0.0
    %223 = vmatpush1.msra.mxu0 0.0
    %224 = vmatprep.subr.mxu0 0.0
    %225 = vmatpush1.msra.mxu0 0.0
    %226 = vmatprep.subr.mxu0 0.0
    %227 = vmatpush1.msra.mxu0 0.0
    %228 = vmatprep.subr.mxu0 0.0
    %229 = vmatpush1.msra.mxu0 0.0
    %230 = vmatprep.subr.mxu0 0.0
    %231 = vmatpush1.msra.mxu0 0.0
    %232 = vmatprep.subr.mxu0 0.0
    %233 = vmatpush1.msra.mxu0 0.0
    %234 = vmatprep.subr.mxu0 0.0
    %235 = vmatpush1.msra.mxu0 0.0
    %236 = vmatprep.subr.mxu0 0.0
    %237 = vmatpush1.msra.mxu0 0.0
    %238 = vmatprep.subr.mxu0 0.0
    %239 = vmatpush1.msra.mxu0 0.0
    %240 = vmatprep.subr.mxu0 0.0
    %241 = vmatpush1.msra.mxu0 0.0
    %242 = vmatprep.subr.mxu0 0.0
    %243 = vmatpush1.msra.mxu0 0.0
    %244 = vmatprep.subr.mxu0 0.0
    %245 = vmatpush1.msra.mxu0 0.0
    %246 = vmatprep.subr.mxu0 0.0
    %247 = vmatpush1.msra.mxu0 0.0
    %248 = vmatprep.subr.mxu0 0.0
    %249 = vmatpush1.msra.mxu0 0.0
    %250 = vmatprep.subr.mxu0 0.0
    %251 = vmatpush1.msra.mxu0 0.0
    %252 = vmatprep.subr.mxu0 0.0
    %253 = vmatpush1.msra.mxu0 0.0
    %254 = vmatprep.mubr.f32.mxu0 0.0
    %255 = vmatmul.mubr.f32.gmra.mrb[0].mxu0 %v99
    %v256 = vpop.f32.mrb[0].mxu0
    %v257 = vadd.f32 %v85, %v256
    %v258 = vpop.f32.mrb[0].mxu0
    %v259 = vadd.f32 %v89, %v258
    %260 = vmatprep.mubr.f32.mxu0 0.0
    %261 = vmatmul.mubr.f32.gmra.mrb[0].mxu0 %v102
    %v262 = vpop.f32.mrb[0].mxu0
    %v263 = vadd.f32 %v85, %v262
    %v264 = vpop.f32.mrb[0].mxu0
    %v265 = vadd.f32 %v89, %v264
    %266 = vdwg.mxu0
    %v267 = vld [vmem:[%s3] sm:$0xff]
    %v268 = vld [vmem:[%s3 + $0x8] sm:$0xff]
    %v269 = vld [vmem:[%s3 + $0x10] sm:$0xff]
    %v270 = vld [vmem:[%s3 + $0x18] sm:$0xff]
    %v271 = vld [vmem:[%s3 + $0x20] sm:$0xff]
    %v272 = vld [vmem:[%s3 + $0x28] sm:$0xff]
    %v273 = vld [vmem:[%s3 + $0x30] sm:$0xff]
    %v274 = vld [vmem:[%s3 + $0x38] sm:$0xff]
    %v275 = vld [vmem:[%s3 + $0x40] sm:$0xff]
    %v276 = vld [vmem:[%s3 + $0x48] sm:$0xff]
    %v277 = vld [vmem:[%s3 + $0x50] sm:$0xff]
    %v278 = vld [vmem:[%s3 + $0x58] sm:$0xff]
    %v279 = vld [vmem:[%s3 + $0x60] sm:$0xff]
    %v280 = vld [vmem:[%s3 + $0x68] sm:$0xff]
    %v281 = vld [vmem:[%s3 + $0x70] sm:$0xff]
    %v282 = vld [vmem:[%s3 + $0x78] sm:$0xff]
    %v283 = vld [vmem:[%s3 + $0x80] sm:$0xff]
    %v284 = vld [vmem:[%s3 + $0x88] sm:$0xff]
    %v285 = vld [vmem:[%s3 + $0x90] sm:$0xff]
    %v286 = vld [vmem:[%s3 + $0x98] sm:$0xff]
    %v287 = vld [vmem:[%s3 + $0xa0] sm:$0xff]
    %v288 = vld [vmem:[%s3 + $0xa8] sm:$0xff]
    %v289 = vld [vmem:[%s3 + $0xb0] sm:$0xff]
    %v290 = vld [vmem:[%s3 + $0xb8] sm:$0xff]
    %v291 = vld [vmem:[%s3 + $0xc0] sm:$0xff]
    %v292 = vld [vmem:[%s3 + $0xc8] sm:$0xff]
    %v293 = vld [vmem:[%s3 + $0xd0] sm:$0xff]
    %v294 = vld [vmem:[%s3 + $0xd8] sm:$0xff]
    %v295 = vld [vmem:[%s3 + $0xe0] sm:$0xff]
    %v296 = vld [vmem:[%s3 + $0xe8] sm:$0xff]
    %v297 = vld [vmem:[%s3 + $0xf0] sm:$0xff]
    %v298 = vld [vmem:[%s3 + $0xf8] sm:$0xff]
    %v299 = vld [vmem:[%s3 + $0x100] sm:$0xff]
    %v300 = vld [vmem:[%s3 + $0x108] sm:$0xff]
    %v301 = vld [vmem:[%s3 + $0x110] sm:$0xff]
    %v302 = vld [vmem:[%s3 + $0x118] sm:$0xff]
    %v303 = vld [vmem:[%s3 + $0x120] sm:$0xff]
    %v304 = vld [vmem:[%s3 + $0x128] sm:$0xff]
    %v305 = vld [vmem:[%s3 + $0x130] sm:$0xff]
    %v306 = vld [vmem:[%s3 + $0x138] sm:$0xff]
    %v307 = vld [vmem:[%s3 + $0x140] sm:$0xff]
    %v308 = vld [vmem:[%s3 + $0x148] sm:$0xff]
    %v309 = vld [vmem:[%s3 + $0x150] sm:$0xff]
    %v310 = vld [vmem:[%s3 + $0x158] sm:$0xff]
    %v311 = vld [vmem:[%s3 + $0x160] sm:$0xff]
    %v312 = vld [vmem:[%s3 + $0x168] sm:$0xff]
    %v313 = vld [vmem:[%s3 + $0x170] sm:$0xff]
    %v314 = vld [vmem:[%s3 + $0x178] sm:$0xff]
    %v315 = vld [vmem:[%s3 + $0x180] sm:$0xff]
    %v316 = vld [vmem:[%s3 + $0x188] sm:$0xff]
    %v317 = vld [vmem:[%s3 + $0x190] sm:$0xff]
    %v318 = vld [vmem:[%s3 + $0x198] sm:$0xff]
    %v319 = vld [vmem:[%s3 + $0x1a0] sm:$0xff]
    %v320 = vld [vmem:[%s3 + $0x1a8] sm:$0xff]
    %v321 = vld [vmem:[%s3 + $0x1b0] sm:$0xff]
    %v322 = vld [vmem:[%s3 + $0x1b8] sm:$0xff]
    %v323 = vld [vmem:[%s3 + $0x1c0] sm:$0xff]
    %v324 = vld [vmem:[%s3 + $0x1c8] sm:$0xff]
    %v325 = vld [vmem:[%s3 + $0x1d0] sm:$0xff]
    %v326 = vld [vmem:[%s3 + $0x1d8] sm:$0xff]
    %v327 = vld [vmem:[%s3 + $0x1e0] sm:$0xff]
    %v328 = vld [vmem:[%s3 + $0x1e8] sm:$0xff]
    %v329 = vld [vmem:[%s3 + $0x1f0] sm:$0xff]
    %v330 = vld [vmem:[%s3 + $0x1f8] sm:$0xff]
    %v331 = vld [vmem:[#allocation2] sm:$0x3]
    %v332 = vld [vmem:[#allocation3] sm:$0x3]
    %333 = vmatprep.subr.mxu0 %v268
    %334 = vmatpush1.msra.mxu0 %v267
    %335 = vmatprep.subr.mxu0 %v272
    %336 = vmatpush1.msra.mxu0 %v271
    %337 = vmatprep.subr.mxu0 %v276
    %338 = vmatpush1.msra.mxu0 %v275
    %339 = vmatprep.subr.mxu0 %v280
    %340 = vmatpush1.msra.mxu0 %v279
    %341 = vmatprep.subr.mxu0 %v284
    %342 = vmatpush1.msra.mxu0 %v283
    %343 = vmatprep.subr.mxu0 %v288
    %344 = vmatpush1.msra.mxu0 %v287
    %345 = vmatprep.subr.mxu0 %v292
    %346 = vmatpush1.msra.mxu0 %v291
    %347 = vmatprep.subr.mxu0 %v296
    %348 = vmatpush1.msra.mxu0 %v295
    %349 = vmatprep.subr.mxu0 %v300
    %350 = vmatpush1.msra.mxu0 %v299
    %351 = vmatprep.subr.mxu0 %v304
    %352 = vmatpush1.msra.mxu0 %v303
    %353 = vmatprep.subr.mxu0 %v308
    %354 = vmatpush1.msra.mxu0 %v307
    %355 = vmatprep.subr.mxu0 %v312
    %356 = vmatpush1.msra.mxu0 %v311
    %357 = vmatprep.subr.mxu0 %v316
    %358 = vmatpush1.msra.mxu0 %v315
    %359 = vmatprep.subr.mxu0 %v320
    %360 = vmatpush1.msra.mxu0 %v319
    %361 = vmatprep.subr.mxu0 %v324
    %362 = vmatpush1.msra.mxu0 %v323
    %363 = vmatprep.subr.mxu0 %v328
    %364 = vmatpush1.msra.mxu0 %v327
    %365 = vmatprep.subr.mxu0 0.0
    %366 = vmatpush1.msra.mxu0 0.0
    %367 = vmatprep.subr.mxu0 0.0
    %368 = vmatpush1.msra.mxu0 0.0
    %369 = vmatprep.subr.mxu0 0.0
    %370 = vmatpush1.msra.mxu0 0.0
    %371 = vmatprep.subr.mxu0 0.0
    %372 = vmatpush1.msra.mxu0 0.0
    %373 = vmatprep.subr.mxu0 0.0
    %374 = vmatpush1.msra.mxu0 0.0
    %375 = vmatprep.subr.mxu0 0.0
    %376 = vmatpush1.msra.mxu0 0.0
    %377 = vmatprep.subr.mxu0 0.0
    %378 = vmatpush1.msra.mxu0 0.0
    %379 = vmatprep.subr.mxu0 0.0
    %380 = vmatpush1.msra.mxu0 0.0
    %381 = vmatprep.subr.mxu0 0.0
    %382 = vmatpush1.msra.mxu0 0.0
    %383 = vmatprep.subr.mxu0 0.0
    %384 = vmatpush1.msra.mxu0 0.0
    %385 = vmatprep.subr.mxu0 0.0
    %386 = vmatpush1.msra.mxu0 0.0
    %387 = vmatprep.subr.mxu0 0.0
    %388 = vmatpush1.msra.mxu0 0.0
    %389 = vmatprep.subr.mxu0 0.0
    %390 = vmatpush1.msra.mxu0 0.0
    %391 = vmatprep.subr.mxu0 0.0
    %392 = vmatpush1.msra.mxu0 0.0
    %393 = vmatprep.subr.mxu0 0.0
    %394 = vmatpush1.msra.mxu0 0.0
    %395 = vmatprep.subr.mxu0 0.0
    %396 = vmatpush1.msra.mxu0 0.0
    %397 = vmatprep.mubr.f32.mxu0 0.0
    %398 = vmatmul.mubr.f32.gmra.mrb[0].mxu0 %v331
    %v399 = vpop.f32.mrb[0].mxu0
    %v400 = vadd.f32 0.0, %v399
    %v401 = vpop.f32.mrb[0].mxu0
    %v402 = vadd.f32 0.0, %v401
    %403 = vdwg.mxu0
    %404 = vmatprep.subr.mxu0 %v270
    %405 = vmatpush1.msra.mxu0 %v269
    %406 = vmatprep.subr.mxu0 %v274
    %407 = vmatpush1.msra.mxu0 %v273
    %408 = vmatprep.subr.mxu0 %v278
    %409 = vmatpush1.msra.mxu0 %v277
    %410 = vmatprep.subr.mxu0 %v282
    %411 = vmatpush1.msra.mxu0 %v281
    %412 = vmatprep.subr.mxu0 %v286
    %413 = vmatpush1.msra.mxu0 %v285
    %414 = vmatprep.subr.mxu0 %v290
    %415 = vmatpush1.msra.mxu0 %v289
    %416 = vmatprep.subr.mxu0 %v294
    %417 = vmatpush1.msra.mxu0 %v293
    %418 = vmatprep.subr.mxu0 %v298
    %419 = vmatpush1.msra.mxu0 %v297
    %420 = vmatprep.subr.mxu0 %v302
    %421 = vmatpush1.msra.mxu0 %v301
    %422 = vmatprep.subr.mxu0 %v306
    %423 = vmatpush1.msra.mxu0 %v305
    %424 = vmatprep.subr.mxu0 %v310
    %425 = vmatpush1.msra.mxu0 %v309
    %426 = vmatprep.subr.mxu0 %v314
    %427 = vmatpush1.msra.mxu0 %v313
    %428 = vmatprep.subr.mxu0 %v318
    %429 = vmatpush1.msra.mxu0 %v317
    %430 = vmatprep.subr.mxu0 %v322
    %431 = vmatpush1.msra.mxu0 %v321
    %432 = vmatprep.subr.mxu0 %v326
    %433 = vmatpush1.msra.mxu0 %v325
    %434 = vmatprep.subr.mxu0 %v330
    %435 = vmatpush1.msra.mxu0 %v329
    %436 = vmatprep.subr.mxu0 0.0
    %437 = vmatpush1.msra.mxu0 0.0
    %438 = vmatprep.subr.mxu0 0.0
    %439 = vmatpush1.msra.mxu0 0.0
    %440 = vmatprep.subr.mxu0 0.0
    %441 = vmatpush1.msra.mxu0 0.0
    %442 = vmatprep.subr.mxu0 0.0
    %443 = vmatpush1.msra.mxu0 0.0
    %444 = vmatprep.subr.mxu0 0.0
    %445 = vmatpush1.msra.mxu0 0.0
    %446 = vmatprep.subr.mxu0 0.0
    %447 = vmatpush1.msra.mxu0 0.0
    %448 = vmatprep.subr.mxu0 0.0
    %449 = vmatpush1.msra.mxu0 0.0
    %450 = vmatprep.subr.mxu0 0.0
    %451 = vmatpush1.msra.mxu0 0.0
    %452 = vmatprep.subr.mxu0 0.0
    %453 = vmatpush1.msra.mxu0 0.0
    %454 = vmatprep.subr.mxu0 0.0
    %455 = vmatpush1.msra.mxu0 0.0
    %456 = vmatprep.subr.mxu0 0.0
    %457 = vmatpush1.msra.mxu0 0.0
    %458 = vmatprep.subr.mxu0 0.0
    %459 = vmatpush1.msra.mxu0 0.0
    %460 = vmatprep.subr.mxu0 0.0
    %461 = vmatpush1.msra.mxu0 0.0
    %462 = vmatprep.subr.mxu0 0.0
    %463 = vmatpush1.msra.mxu0 0.0
    %464 = vmatprep.subr.mxu0 0.0
    %465 = vmatpush1.msra.mxu0 0.0
    %466 = vmatprep.subr.mxu0 0.0
    %467 = vmatpush1.msra.mxu0 0.0
    %468 = vmatprep.mubr.f32.mxu0 0.0
    %469 = vmatmul.mubr.f32.gmra.mrb[0].mxu0 %v331
    %v470 = vpop.f32.mrb[0].mxu0
    %v471 = vadd.f32 0.0, %v470
    %v472 = vpop.f32.mrb[0].mxu0
    %v473 = vadd.f32 0.0, %v472
    %474 = vdwg.mxu0
    %v479 = vrot.slane %v400, 1
    %v480 = vrot.slane %v402, 1
    %v481 = vrot.slane %v471, 1
    %v482 = vrot.slane %v473, 1
    %v491 = vadd.f32 %v180, %v400
    %v492 = vadd.f32 %v182, %v402
    %v493 = vadd.f32 %v257, %v471
    %v494 = vadd.f32 %v259, %v473
    %v495 = vadd.f32 %v186, %v479
    %v496 = vadd.f32 %v188, %v480
    %v497 = vadd.f32 %v263, %v481
    %v498 = vadd.f32 %v265, %v482
    %v499 = vxor.u32 %v491, 2147483648
    %v500 = vxor.u32 %v495, 2147483648
    %v501 = vmul.f32 %v499, 1.442695
    %v502 = vpow.pop %v501
    %v503 = vmul.f32 %v500, 1.442695
    %v504 = vpow.pop %v503
    %v505 = vadd.f32 %v502, 1.0
    %v506 = vadd.f32 %v504, 1.0
    %v507 = vrcp.pop %v505
    %v508 = vmul.f32 1.0, %v507
    %v509 = vrcp.pop %v506
    %v510 = vmul.f32 1.0, %v509
    %v511 = vxor.u32 %v492, 2147483648
    %v512 = vxor.u32 %v496, 2147483648
    %v513 = vmul.f32 %v511, 1.442695
    %v514 = vpow.pop %v513
    %v515 = vmul.f32 %v512, 1.442695
    %v516 = vpow.pop %v515
    %v517 = vadd.f32 %v514, 1.0
    %v518 = vadd.f32 %v516, 1.0
    %v519 = vrcp.pop %v517
    %v520 = vmul.f32 1.0, %v519
    %v521 = vrcp.pop %v518
    %v522 = vmul.f32 1.0, %v521
    %v523 = vtanh.pop %v493
    %v524 = vtanh.pop %v497
    %v525 = vxor.u32 %v494, 2147483648
    %v526 = vxor.u32 %v498, 2147483648
    %v527 = vmul.f32 %v525, 1.442695
    %v528 = vpow.pop %v527
    %v529 = vmul.f32 %v526, 1.442695
    %v530 = vpow.pop %v529
    %v531 = vadd.f32 %v528, 1.0
    %v532 = vadd.f32 %v530, 1.0
    %v533 = vrcp.pop %v531
    %v534 = vmul.f32 1.0, %v533
    %v535 = vrcp.pop %v532
    %v536 = vmul.f32 1.0, %v535
    %v538 = vrot.slane %v332, 1
    %v541 = vmul.f32 %v520, %v332
    %v542 = vmul.f32 %v522, %v538
    %v543 = vmul.f32 %v508, %v523
    %v544 = vmul.f32 %v510, %v524
    %v545 = vadd.f32 %v541, %v543
    %v546 = vadd.f32 %v542, %v544
    %v547 = vtanh.pop %v545
    %v548 = vtanh.pop %v546
    %v549 = vmul.f32 %v534, %v547
    %v550 = vmul.f32 %v536, %v548
    %551 = vst [vmem:[#allocation4] sm:$0x1] %v549
    %552 = vst [vmem:[#allocation4 + $0x8] sm:$0x1] %v550
    %v555 = vrot.slane %v550, 7
    %vm556 = vcmask 1041409
    %v557 = vsel %vm556, %v555, %v549
    %559 = vmatprep.subr.mxu0 %v268
    %560 = vmatpush1.msra.mxu0 %v267
    %561 = vmatprep.subr.mxu0 %v272
    %562 = vmatpush1.msra.mxu0 %v271
    %563 = vmatprep.subr.mxu0 %v276
    %564 = vmatpush1.msra.mxu0 %v275
    %565 = vmatprep.subr.mxu0 %v280
    %566 = vmatpush1.msra.mxu0 %v279
    %567 = vmatprep.subr.mxu0 %v284
    %568 = vmatpush1.msra.mxu0 %v283
    %569 = vmatprep.subr.mxu0 %v288
    %570 = vmatpush1.msra.mxu0 %v287
    %571 = vmatprep.subr.mxu0 %v292
    %572 = vmatpush1.msra.mxu0 %v291
    %573 = vmatprep.subr.mxu0 %v296
    %574 = vmatpush1.msra.mxu0 %v295
    %575 = vmatprep.subr.mxu0 %v300
    %576 = vmatpush1.msra.mxu0 %v299
    %577 = vmatprep.subr.mxu0 %v304
    %578 = vmatpush1.msra.mxu0 %v303
    %579 = vmatprep.subr.mxu0 %v308
    %580 = vmatpush1.msra.mxu0 %v307
    %581 = vmatprep.subr.mxu0 %v312
    %582 = vmatpush1.msra.mxu0 %v311
    %583 = vmatprep.subr.mxu0 %v316
    %584 = vmatpush1.msra.mxu0 %v315
    %585 = vmatprep.subr.mxu0 %v320
    %586 = vmatpush1.msra.mxu0 %v319
    %587 = vmatprep.subr.mxu0 %v324
    %588 = vmatpush1.msra.mxu0 %v323
    %589 = vmatprep.subr.mxu0 %v328
    %590 = vmatpush1.msra.mxu0 %v327
    %591 = vmatprep.subr.mxu0 0.0
    %592 = vmatpush1.msra.mxu0 0.0
    %593 = vmatprep.subr.mxu0 0.0
    %594 = vmatpush1.msra.mxu0 0.0
    %595 = vmatprep.subr.mxu0 0.0
    %596 = vmatpush1.msra.mxu0 0.0
    %597 = vmatprep.subr.mxu0 0.0
    %598 = vmatpush1.msra.mxu0 0.0
    %599 = vmatprep.subr.mxu0 0.0
    %600 = vmatpush1.msra.mxu0 0.0
    %601 = vmatprep.subr.mxu0 0.0
    %602 = vmatpush1.msra.mxu0 0.0
    %603 = vmatprep.subr.mxu0 0.0
    %604 = vmatpush1.msra.mxu0 0.0
    %605 = vmatprep.subr.mxu0 0.0
    %606 = vmatpush1.msra.mxu0 0.0
    %607 = vmatprep.subr.mxu0 0.0
    %608 = vmatpush1.msra.mxu0 0.0
    %609 = vmatprep.subr.mxu0 0.0
    %610 = vmatpush1.msra.mxu0 0.0
    %611 = vmatprep.subr.mxu0 0.0
    %612 = vmatpush1.msra.mxu0 0.0
    %613 = vmatprep.subr.mxu0 0.0
    %614 = vmatpush1.msra.mxu0 0.0
    %615 = vmatprep.subr.mxu0 0.0
    %616 = vmatpush1.msra.mxu0 0.0
    %617 = vmatprep.subr.mxu0 0.0
    %618 = vmatpush1.msra.mxu0 0.0
    %619 = vmatprep.subr.mxu0 0.0
    %620 = vmatpush1.msra.mxu0 0.0
    %621 = vmatprep.subr.mxu0 0.0
    %622 = vmatpush1.msra.mxu0 0.0
    %623 = vmatprep.mubr.f32.mxu0 0.0
    %624 = vmatmul.mubr.f32.gmra.mrb[0].mxu0 %v557
    %v625 = vpop.f32.mrb[0].mxu0
    %v626 = vadd.f32 0.0, %v625
    %v627 = vpop.f32.mrb[0].mxu0
    %v628 = vadd.f32 0.0, %v627
    %629 = vdwg.mxu0
    %630 = vmatprep.subr.mxu0 %v270
    %631 = vmatpush1.msra.mxu0 %v269
    %632 = vmatprep.subr.mxu0 %v274
    %633 = vmatpush1.msra.mxu0 %v273
    %634 = vmatprep.subr.mxu0 %v278
    %635 = vmatpush1.msra.mxu0 %v277
    %636 = vmatprep.subr.mxu0 %v282
    %637 = vmatpush1.msra.mxu0 %v281
    %638 = vmatprep.subr.mxu0 %v286
    %639 = vmatpush1.msra.mxu0 %v285
    %640 = vmatprep.subr.mxu0 %v290
    %641 = vmatpush1.msra.mxu0 %v289
    %642 = vmatprep.subr.mxu0 %v294
    %643 = vmatpush1.msra.mxu0 %v293
    %644 = vmatprep.subr.mxu0 %v298
    %645 = vmatpush1.msra.mxu0 %v297
    %646 = vmatprep.subr.mxu0 %v302
    %647 = vmatpush1.msra.mxu0 %v301
    %648 = vmatprep.subr.mxu0 %v306
    %649 = vmatpush1.msra.mxu0 %v305
    %650 = vmatprep.subr.mxu0 %v310
    %651 = vmatpush1.msra.mxu0 %v309
    %652 = vmatprep.subr.mxu0 %v314
    %653 = vmatpush1.msra.mxu0 %v313
    %654 = vmatprep.subr.mxu0 %v318
    %655 = vmatpush1.msra.mxu0 %v317
    %656 = vmatprep.subr.mxu0 %v322
    %657 = vmatpush1.msra.mxu0 %v321
    %658 = vmatprep.subr.mxu0 %v326
    %659 = vmatpush1.msra.mxu0 %v325
    %660 = vmatprep.subr.mxu0 %v330
    %661 = vmatpush1.msra.mxu0 %v329
    %662 = vmatprep.subr.mxu0 0.0
    %663 = vmatpush1.msra.mxu0 0.0
    %664 = vmatprep.subr.mxu0 0.0
    %665 = vmatpush1.msra.mxu0 0.0
    %666 = vmatprep.subr.mxu0 0.0
    %667 = vmatpush1.msra.mxu0 0.0
    %668 = vmatprep.subr.mxu0 0.0
    %669 = vmatpush1.msra.mxu0 0.0
    %670 = vmatprep.subr.mxu0 0.0
    %671 = vmatpush1.msra.mxu0 0.0
    %672 = vmatprep.subr.mxu0 0.0
    %673 = vmatpush1.msra.mxu0 0.0
    %674 = vmatprep.subr.mxu0 0.0
    %675 = vmatpush1.msra.mxu0 0.0
    %676 = vmatprep.subr.mxu0 0.0
    %677 = vmatpush1.msra.mxu0 0.0
    %678 = vmatprep.subr.mxu0 0.0
    %679 = vmatpush1.msra.mxu0 0.0
    %680 = vmatprep.subr.mxu0 0.0
    %681 = vmatpush1.msra.mxu0 0.0
    %682 = vmatprep.subr.mxu0 0.0
    %683 = vmatpush1.msra.mxu0 0.0
    %684 = vmatprep.subr.mxu0 0.0
    %685 = vmatpush1.msra.mxu0 0.0
    %686 = vmatprep.subr.mxu0 0.0
    %687 = vmatpush1.msra.mxu0 0.0
    %688 = vmatprep.subr.mxu0 0.0
    %689 = vmatpush1.msra.mxu0 0.0
    %690 = vmatprep.subr.mxu0 0.0
    %691 = vmatpush1.msra.mxu0 0.0
    %692 = vmatprep.subr.mxu0 0.0
    %693 = vmatpush1.msra.mxu0 0.0
    %694 = vmatprep.mubr.f32.mxu0 0.0
    %695 = vmatmul.mubr.f32.gmra.mrb[0].mxu0 %v557
    %v696 = vpop.f32.mrb[0].mxu0
    %v697 = vadd.f32 0.0, %v696
    %v698 = vpop.f32.mrb[0].mxu0
    %v699 = vadd.f32 0.0, %v698
    %700 = vdwg.mxu0
    %v705 = vrot.slane %v626, 7
    %v706 = vrot.slane %v628, 7
    %v707 = vrot.slane %v697, 7
    %v708 = vrot.slane %v699, 7
    %v717 = vadd.f32 %v180, %v705
    %v718 = vadd.f32 %v182, %v706
    %v719 = vadd.f32 %v257, %v707
    %v720 = vadd.f32 %v259, %v708
    %v721 = vadd.f32 %v186, %v626
    %v722 = vadd.f32 %v188, %v628
    %v723 = vadd.f32 %v263, %v697
    %v724 = vadd.f32 %v265, %v699
    %v725 = vxor.u32 %v717, 2147483648
    %v726 = vxor.u32 %v721, 2147483648
    %v727 = vmul.f32 %v725, 1.442695
    %v728 = vpow.pop %v727
    %v729 = vmul.f32 %v726, 1.442695
    %v730 = vpow.pop %v729
    %v731 = vadd.f32 %v728, 1.0
    %v732 = vadd.f32 %v730, 1.0
    %v733 = vrcp.pop %v731
    %v734 = vmul.f32 1.0, %v733
    %v735 = vrcp.pop %v732
    %v736 = vmul.f32 1.0, %v735
    %v737 = vxor.u32 %v718, 2147483648
    %v738 = vxor.u32 %v722, 2147483648
    %v739 = vmul.f32 %v737, 1.442695
    %v740 = vpow.pop %v739
    %v741 = vmul.f32 %v738, 1.442695
    %v742 = vpow.pop %v741
    %v743 = vadd.f32 %v740, 1.0
    %v744 = vadd.f32 %v742, 1.0
    %v745 = vrcp.pop %v743
    %v746 = vmul.f32 1.0, %v745
    %v747 = vrcp.pop %v744
    %v748 = vmul.f32 1.0, %v747
    %v749 = vtanh.pop %v719
    %v750 = vtanh.pop %v723
    %v751 = vxor.u32 %v720, 2147483648
    %v752 = vxor.u32 %v724, 2147483648
    %v753 = vmul.f32 %v751, 1.442695
    %v754 = vpow.pop %v753
    %v755 = vmul.f32 %v752, 1.442695
    %v756 = vpow.pop %v755
    %v757 = vadd.f32 %v754, 1.0
    %v758 = vadd.f32 %v756, 1.0
    %v759 = vrcp.pop %v757
    %v760 = vmul.f32 1.0, %v759
    %v761 = vrcp.pop %v758
    %v762 = vmul.f32 1.0, %v761
    %v765 = vrot.slane %v545, 7
    %v766 = vrot.slane %v546, 7
    %v769 = vmul.f32 %v746, %v765
    %v770 = vmul.f32 %v748, %v766
    %v771 = vmul.f32 %v734, %v749
    %v772 = vmul.f32 %v736, %v750
    %v773 = vadd.f32 %v769, %v771
    %v774 = vadd.f32 %v770, %v772
    %v775 = vtanh.pop %v773
    %v776 = vtanh.pop %v774
    %v777 = vmul.f32 %v760, %v775
    %v778 = vmul.f32 %v762, %v776
    %779 = vst [vmem:[#allocation4] sm:$0x2] %v777
    %780 = vst [vmem:[#allocation4 + $0x8] sm:$0x2] %v778
    %v783 = vrot.slane %v777, 1
    %v784 = vsel %vm556, %v778, %v783
    %786 = vmatprep.subr.mxu0 %v268
    %787 = vmatpush1.msra.mxu0 %v267
    %788 = vmatprep.subr.mxu0 %v272
    %789 = vmatpush1.msra.mxu0 %v271
    %790 = vmatprep.subr.mxu0 %v276
    %791 = vmatpush1.msra.mxu0 %v275
    %792 = vmatprep.subr.mxu0 %v280
    %793 = vmatpush1.msra.mxu0 %v279
    %794 = vmatprep.subr.mxu0 %v284
    %795 = vmatpush1.msra.mxu0 %v283
    %796 = vmatprep.subr.mxu0 %v288
    %797 = vmatpush1.msra.mxu0 %v287
    %798 = vmatprep.subr.mxu0 %v292
    %799 = vmatpush1.msra.mxu0 %v291
    %800 = vmatprep.subr.mxu0 %v296
    %801 = vmatpush1.msra.mxu0 %v295
    %802 = vmatprep.subr.mxu0 %v300
    %803 = vmatpush1.msra.mxu0 %v299
    %804 = vmatprep.subr.mxu0 %v304
    %805 = vmatpush1.msra.mxu0 %v303
    %806 = vmatprep.subr.mxu0 %v308
    %807 = vmatpush1.msra.mxu0 %v307
    %808 = vmatprep.subr.mxu0 %v312
    %809 = vmatpush1.msra.mxu0 %v311
    %810 = vmatprep.subr.mxu0 %v316
    %811 = vmatpush1.msra.mxu0 %v315
    %812 = vmatprep.subr.mxu0 %v320
    %813 = vmatpush1.msra.mxu0 %v319
    %814 = vmatprep.subr.mxu0 %v324
    %815 = vmatpush1.msra.mxu0 %v323
    %816 = vmatprep.subr.mxu0 %v328
    %817 = vmatpush1.msra.mxu0 %v327
    %818 = vmatprep.subr.mxu0 0.0
    %819 = vmatpush1.msra.mxu0 0.0
    %820 = vmatprep.subr.mxu0 0.0
    %821 = vmatpush1.msra.mxu0 0.0
    %822 = vmatprep.subr.mxu0 0.0
    %823 = vmatpush1.msra.mxu0 0.0
    %824 = vmatprep.subr.mxu0 0.0
    %825 = vmatpush1.msra.mxu0 0.0
    %826 = vmatprep.subr.mxu0 0.0
    %827 = vmatpush1.msra.mxu0 0.0
    %828 = vmatprep.subr.mxu0 0.0
    %829 = vmatpush1.msra.mxu0 0.0
    %830 = vmatprep.subr.mxu0 0.0
    %831 = vmatpush1.msra.mxu0 0.0
    %832 = vmatprep.subr.mxu0 0.0
    %833 = vmatpush1.msra.mxu0 0.0
    %834 = vmatprep.subr.mxu0 0.0
    %835 = vmatpush1.msra.mxu0 0.0
    %836 = vmatprep.subr.mxu0 0.0
    %837 = vmatpush1.msra.mxu0 0.0
    %838 = vmatprep.subr.mxu0 0.0
    %839 = vmatpush1.msra.mxu0 0.0
    %840 = vmatprep.subr.mxu0 0.0
    %841 = vmatpush1.msra.mxu0 0.0
    %842 = vmatprep.subr.mxu0 0.0
    %843 = vmatpush1.msra.mxu0 0.0
    %844 = vmatprep.subr.mxu0 0.0
    %845 = vmatpush1.msra.mxu0 0.0
    %846 = vmatprep.subr.mxu0 0.0
    %847 = vmatpush1.msra.mxu0 0.0
    %848 = vmatprep.subr.mxu0 0.0
    %849 = vmatpush1.msra.mxu0 0.0
    %850 = vmatprep.mubr.f32.mxu0 0.0
    %851 = vmatmul.mubr.f32.gmra.mrb[0].mxu0 %v784
    %v852 = vpop.f32.mrb[0].mxu0
    %v853 = vadd.f32 0.0, %v852
    %v854 = vpop.f32.mrb[0].mxu0
    %v855 = vadd.f32 0.0, %v854
    %856 = vdwg.mxu0
    %857 = vmatprep.subr.mxu0 %v270
    %858 = vmatpush1.msra.mxu0 %v269
    %859 = vmatprep.subr.mxu0 %v274
    %860 = vmatpush1.msra.mxu0 %v273
    %861 = vmatprep.subr.mxu0 %v278
    %862 = vmatpush1.msra.mxu0 %v277
    %863 = vmatprep.subr.mxu0 %v282
    %864 = vmatpush1.msra.mxu0 %v281
    %865 = vmatprep.subr.mxu0 %v286
    %866 = vmatpush1.msra.mxu0 %v285
    %867 = vmatprep.subr.mxu0 %v290
    %868 = vmatpush1.msra.mxu0 %v289
    %869 = vmatprep.subr.mxu0 %v294
    %870 = vmatpush1.msra.mxu0 %v293
    %871 = vmatprep.subr.mxu0 %v298
    %872 = vmatpush1.msra.mxu0 %v297
    %873 = vmatprep.subr.mxu0 %v302
    %874 = vmatpush1.msra.mxu0 %v301
    %875 = vmatprep.subr.mxu0 %v306
    %876 = vmatpush1.msra.mxu0 %v305
    %877 = vmatprep.subr.mxu0 %v310
    %878 = vmatpush1.msra.mxu0 %v309
    %879 = vmatprep.subr.mxu0 %v314
    %880 = vmatpush1.msra.mxu0 %v313
    %881 = vmatprep.subr.mxu0 %v318
    %882 = vmatpush1.msra.mxu0 %v317
    %883 = vmatprep.subr.mxu0 %v322
    %884 = vmatpush1.msra.mxu0 %v321
    %885 = vmatprep.subr.mxu0 %v326
    %886 = vmatpush1.msra.mxu0 %v325
    %887 = vmatprep.subr.mxu0 %v330
    %888 = vmatpush1.msra.mxu0 %v329
    %889 = vmatprep.subr.mxu0 0.0
    %890 = vmatpush1.msra.mxu0 0.0
    %891 = vmatprep.subr.mxu0 0.0
    %892 = vmatpush1.msra.mxu0 0.0
    %893 = vmatprep.subr.mxu0 0.0
    %894 = vmatpush1.msra.mxu0 0.0
    %895 = vmatprep.subr.mxu0 0.0
    %896 = vmatpush1.msra.mxu0 0.0
    %897 = vmatprep.subr.mxu0 0.0
    %898 = vmatpush1.msra.mxu0 0.0
    %899 = vmatprep.subr.mxu0 0.0
    %900 = vmatpush1.msra.mxu0 0.0
    %901 = vmatprep.subr.mxu0 0.0
    %902 = vmatpush1.msra.mxu0 0.0
    %903 = vmatprep.subr.mxu0 0.0
    %904 = vmatpush1.msra.mxu0 0.0
    %905 = vmatprep.subr.mxu0 0.0
    %906 = vmatpush1.msra.mxu0 0.0
    %907 = vmatprep.subr.mxu0 0.0
    %908 = vmatpush1.msra.mxu0 0.0
    %909 = vmatprep.subr.mxu0 0.0
    %910 = vmatpush1.msra.mxu0 0.0
    %911 = vmatprep.subr.mxu0 0.0
    %912 = vmatpush1.msra.mxu0 0.0
    %913 = vmatprep.subr.mxu0 0.0
    %914 = vmatpush1.msra.mxu0 0.0
    %915 = vmatprep.subr.mxu0 0.0
    %916 = vmatpush1.msra.mxu0 0.0
    %917 = vmatprep.subr.mxu0 0.0
    %918 = vmatpush1.msra.mxu0 0.0
    %919 = vmatprep.subr.mxu0 0.0
    %920 = vmatpush1.msra.mxu0 0.0
    %921 = vmatprep.mubr.f32.mxu0 0.0
    %922 = vmatmul.mubr.f32.gmra.mrb[0].mxu0 %v784
    %v923 = vpop.f32.mrb[0].mxu0
    %v924 = vadd.f32 0.0, %v923
    %v925 = vpop.f32.mrb[0].mxu0
    %v926 = vadd.f32 0.0, %v925
    %927 = vdwg.mxu0
    %v932 = vrot.slane %v853, 6
    %v933 = vrot.slane %v855, 6
    %v934 = vrot.slane %v924, 6
    %v935 = vrot.slane %v926, 6
    %v936 = vrot.slane %v853, 7
    %v937 = vrot.slane %v855, 7
    %v938 = vrot.slane %v924, 7
    %v939 = vrot.slane %v926, 7
    %v948 = vadd.f32 %v180, %v932
    %v949 = vadd.f32 %v182, %v933
    %v950 = vadd.f32 %v257, %v934
    %v951 = vadd.f32 %v259, %v935
    %v952 = vadd.f32 %v186, %v936
    %v953 = vadd.f32 %v188, %v937
    %v954 = vadd.f32 %v263, %v938
    %v955 = vadd.f32 %v265, %v939
    %v956 = vxor.u32 %v948, 2147483648
    %v957 = vxor.u32 %v952, 2147483648
    %v958 = vmul.f32 %v956, 1.442695
    %v959 = vpow.pop %v958
    %v960 = vmul.f32 %v957, 1.442695
    %v961 = vpow.pop %v960
    %v962 = vadd.f32 %v959, 1.0
    %v963 = vadd.f32 %v961, 1.0
    %v964 = vrcp.pop %v962
    %v965 = vmul.f32 1.0, %v964
    %v966 = vrcp.pop %v963
    %v967 = vmul.f32 1.0, %v966
    %v968 = vxor.u32 %v949, 2147483648
    %v969 = vxor.u32 %v953, 2147483648
    %v970 = vmul.f32 %v968, 1.442695
    %v971 = vpow.pop %v970
    %v972 = vmul.f32 %v969, 1.442695
    %v973 = vpow.pop %v972
    %v974 = vadd.f32 %v971, 1.0
    %v975 = vadd.f32 %v973, 1.0
    %v976 = vrcp.pop %v974
    %v977 = vmul.f32 1.0, %v976
    %v978 = vrcp.pop %v975
    %v979 = vmul.f32 1.0, %v978
    %v980 = vtanh.pop %v950
    %v981 = vtanh.pop %v954
    %v982 = vxor.u32 %v951, 2147483648
    %v983 = vxor.u32 %v955, 2147483648
    %v984 = vmul.f32 %v982, 1.442695
    %v985 = vpow.pop %v984
    %v986 = vmul.f32 %v983, 1.442695
    %v987 = vpow.pop %v986
    %v988 = vadd.f32 %v985, 1.0
    %v989 = vadd.f32 %v987, 1.0
    %v990 = vrcp.pop %v988
    %v991 = vmul.f32 1.0, %v990
    %v992 = vrcp.pop %v989
    %v993 = vmul.f32 1.0, %v992
    %v996 = vrot.slane %v773, 7
    %v997 = vrot.slane %v774, 7
    %v1000 = vmul.f32 %v977, %v996
    %v1001 = vmul.f32 %v979, %v997
    %v1002 = vmul.f32 %v965, %v980
    %v1003 = vmul.f32 %v967, %v981
    %v1004 = vadd.f32 %v1000, %v1002
    %v1005 = vadd.f32 %v1001, %v1003
    %v1006 = vtanh.pop %v1004
    %v1007 = vtanh.pop %v1005
    %v1008 = vmul.f32 %v991, %v1006
    %v1009 = vmul.f32 %v993, %v1007
    %1010 = vst [vmem:[#allocation4] sm:$0x4] %v1008
    %1011 = vst [vmem:[#allocation4 + $0x8] sm:$0x4] %v1009
    %v1014 = vrot.slane %v1008, 2
    %v1015 = vrot.slane %v1009, 1
    %v1016 = vsel %vm556, %v1015, %v1014
    %1018 = vmatprep.subr.mxu0 %v268
    %1019 = vmatpush1.msra.mxu0 %v267
    %1020 = vmatprep.subr.mxu0 %v272
    %1021 = vmatpush1.msra.mxu0 %v271
    %1022 = vmatprep.subr.mxu0 %v276
    %1023 = vmatpush1.msra.mxu0 %v275
    %1024 = vmatprep.subr.mxu0 %v280
    %1025 = vmatpush1.msra.mxu0 %v279
    %1026 = vmatprep.subr.mxu0 %v284
    %1027 = vmatpush1.msra.mxu0 %v283
    %1028 = vmatprep.subr.mxu0 %v288
    %1029 = vmatpush1.msra.mxu0 %v287
    %1030 = vmatprep.subr.mxu0 %v292
    %1031 = vmatpush1.msra.mxu0 %v291
    %1032 = vmatprep.subr.mxu0 %v296
    %1033 = vmatpush1.msra.mxu0 %v295
    %1034 = vmatprep.subr.mxu0 %v300
    %1035 = vmatpush1.msra.mxu0 %v299
    %1036 = vmatprep.subr.mxu0 %v304
    %1037 = vmatpush1.msra.mxu0 %v303
    %1038 = vmatprep.subr.mxu0 %v308
    %1039 = vmatpush1.msra.mxu0 %v307
    %1040 = vmatprep.subr.mxu0 %v312
    %1041 = vmatpush1.msra.mxu0 %v311
    %1042 = vmatprep.subr.mxu0 %v316
    %1043 = vmatpush1.msra.mxu0 %v315
    %1044 = vmatprep.subr.mxu0 %v320
    %1045 = vmatpush1.msra.mxu0 %v319
    %1046 = vmatprep.subr.mxu0 %v324
    %1047 = vmatpush1.msra.mxu0 %v323
    %1048 = vmatprep.subr.mxu0 %v328
    %1049 = vmatpush1.msra.mxu0 %v327
    %1050 = vmatprep.subr.mxu0 0.0
    %1051 = vmatpush1.msra.mxu0 0.0
    %1052 = vmatprep.subr.mxu0 0.0
    %1053 = vmatpush1.msra.mxu0 0.0
    %1054 = vmatprep.subr.mxu0 0.0
    %1055 = vmatpush1.msra.mxu0 0.0
    %1056 = vmatprep.subr.mxu0 0.0
    %1057 = vmatpush1.msra.mxu0 0.0
    %1058 = vmatprep.subr.mxu0 0.0
    %1059 = vmatpush1.msra.mxu0 0.0
    %1060 = vmatprep.subr.mxu0 0.0
    %1061 = vmatpush1.msra.mxu0 0.0
    %1062 = vmatprep.subr.mxu0 0.0
    %1063 = vmatpush1.msra.mxu0 0.0
    %1064 = vmatprep.subr.mxu0 0.0
    %1065 = vmatpush1.msra.mxu0 0.0
    %1066 = vmatprep.subr.mxu0 0.0
    %1067 = vmatpush1.msra.mxu0 0.0
    %1068 = vmatprep.subr.mxu0 0.0
    %1069 = vmatpush1.msra.mxu0 0.0
    %1070 = vmatprep.subr.mxu0 0.0
    %1071 = vmatpush1.msra.mxu0 0.0
    %1072 = vmatprep.subr.mxu0 0.0
    %1073 = vmatpush1.msra.mxu0 0.0
    %1074 = vmatprep.subr.mxu0 0.0
    %1075 = vmatpush1.msra.mxu0 0.0
    %1076 = vmatprep.subr.mxu0 0.0
    %1077 = vmatpush1.msra.mxu0 0.0
    %1078 = vmatprep.subr.mxu0 0.0
    %1079 = vmatpush1.msra.mxu0 0.0
    %1080 = vmatprep.subr.mxu0 0.0
    %1081 = vmatpush1.msra.mxu0 0.0
    %1082 = vmatprep.mubr.f32.mxu0 0.0
    %1083 = vmatmul.mubr.f32.gmra.mrb[0].mxu0 %v1016
    %v1084 = vpop.f32.mrb[0].mxu0
    %v1085 = vadd.f32 0.0, %v1084
    %v1086 = vpop.f32.mrb[0].mxu0
    %v1087 = vadd.f32 0.0, %v1086
    %1088 = vdwg.mxu0
    %1089 = vmatprep.subr.mxu0 %v270
    %1090 = vmatpush1.msra.mxu0 %v269
    %1091 = vmatprep.subr.mxu0 %v274
    %1092 = vmatpush1.msra.mxu0 %v273
    %1093 = vmatprep.subr.mxu0 %v278
    %1094 = vmatpush1.msra.mxu0 %v277
    %1095 = vmatprep.subr.mxu0 %v282
    %1096 = vmatpush1.msra.mxu0 %v281
    %1097 = vmatprep.subr.mxu0 %v286
    %1098 = vmatpush1.msra.mxu0 %v285
    %1099 = vmatprep.subr.mxu0 %v290
    %1100 = vmatpush1.msra.mxu0 %v289
    %1101 = vmatprep.subr.mxu0 %v294
    %1102 = vmatpush1.msra.mxu0 %v293
    %1103 = vmatprep.subr.mxu0 %v298
    %1104 = vmatpush1.msra.mxu0 %v297
    %1105 = vmatprep.subr.mxu0 %v302
    %1106 = vmatpush1.msra.mxu0 %v301
    %1107 = vmatprep.subr.mxu0 %v306
    %1108 = vmatpush1.msra.mxu0 %v305
    %1109 = vmatprep.subr.mxu0 %v310
    %1110 = vmatpush1.msra.mxu0 %v309
    %1111 = vmatprep.subr.mxu0 %v314
    %1112 = vmatpush1.msra.mxu0 %v313
    %1113 = vmatprep.subr.mxu0 %v318
    %1114 = vmatpush1.msra.mxu0 %v317
    %1115 = vmatprep.subr.mxu0 %v322
    %1116 = vmatpush1.msra.mxu0 %v321
    %1117 = vmatprep.subr.mxu0 %v326
    %1118 = vmatpush1.msra.mxu0 %v325
    %1119 = vmatprep.subr.mxu0 %v330
    %1120 = vmatpush1.msra.mxu0 %v329
    %1121 = vmatprep.subr.mxu0 0.0
    %1122 = vmatpush1.msra.mxu0 0.0
    %1123 = vmatprep.subr.mxu0 0.0
    %1124 = vmatpush1.msra.mxu0 0.0
    %1125 = vmatprep.subr.mxu0 0.0
    %1126 = vmatpush1.msra.mxu0 0.0
    %1127 = vmatprep.subr.mxu0 0.0
    %1128 = vmatpush1.msra.mxu0 0.0
    %1129 = vmatprep.subr.mxu0 0.0
    %1130 = vmatpush1.msra.mxu0 0.0
    %1131 = vmatprep.subr.mxu0 0.0
    %1132 = vmatpush1.msra.mxu0 0.0
    %1133 = vmatprep.subr.mxu0 0.0
    %1134 = vmatpush1.msra.mxu0 0.0
    %1135 = vmatprep.subr.mxu0 0.0
    %1136 = vmatpush1.msra.mxu0 0.0
    %1137 = vmatprep.subr.mxu0 0.0
    %1138 = vmatpush1.msra.mxu0 0.0
    %1139 = vmatprep.subr.mxu0 0.0
    %1140 = vmatpush1.msra.mxu0 0.0
    %1141 = vmatprep.subr.mxu0 0.0
    %1142 = vmatpush1.msra.mxu0 0.0
    %1143 = vmatprep.subr.mxu0 0.0
    %1144 = vmatpush1.msra.mxu0 0.0
    %1145 = vmatprep.subr.mxu0 0.0
    %1146 = vmatpush1.msra.mxu0 0.0
    %1147 = vmatprep.subr.mxu0 0.0
    %1148 = vmatpush1.msra.mxu0 0.0
    %1149 = vmatprep.subr.mxu0 0.0
    %1150 = vmatpush1.msra.mxu0 0.0
    %1151 = vmatprep.subr.mxu0 0.0
    %1152 = vmatpush1.msra.mxu0 0.0
    %1153 = vmatprep.mubr.f32.mxu0 0.0
    %1154 = vmatmul.mubr.f32.gmra.mrb[0].mxu0 %v1016
    %v1155 = vpop.f32.mrb[0].mxu0
    %v1156 = vadd.f32 0.0, %v1155
    %v1157 = vpop.f32.mrb[0].mxu0
    %v1158 = vadd.f32 0.0, %v1157
    %1159 = vdwg.mxu0
    %v1164 = vrot.slane %v1085, 5
    %v1165 = vrot.slane %v1087, 5
    %v1166 = vrot.slane %v1156, 5
    %v1167 = vrot.slane %v1158, 5
    %v1168 = vrot.slane %v1085, 6
    %v1169 = vrot.slane %v1087, 6
    %v1170 = vrot.slane %v1156, 6
    %v1171 = vrot.slane %v1158, 6
    %v1180 = vadd.f32 %v180, %v1164
    %v1181 = vadd.f32 %v182, %v1165
    %v1182 = vadd.f32 %v257, %v1166
    %v1183 = vadd.f32 %v259, %v1167
    %v1184 = vadd.f32 %v186, %v1168
    %v1185 = vadd.f32 %v188, %v1169
    %v1186 = vadd.f32 %v263, %v1170
    %v1187 = vadd.f32 %v265, %v1171
    %v1188 = vxor.u32 %v1180, 2147483648
    %v1189 = vxor.u32 %v1184, 2147483648
    %v1190 = vmul.f32 %v1188, 1.442695
    %v1191 = vpow.pop %v1190
    %v1192 = vmul.f32 %v1189, 1.442695
    %v1193 = vpow.pop %v1192
    %v1194 = vadd.f32 %v1191, 1.0
    %v1195 = vadd.f32 %v1193, 1.0
    %v1196 = vrcp.pop %v1194
    %v1197 = vmul.f32 1.0, %v1196
    %v1198 = vrcp.pop %v1195
    %v1199 = vmul.f32 1.0, %v1198
    %v1200 = vxor.u32 %v1181, 2147483648
    %v1201 = vxor.u32 %v1185, 2147483648
    %v1202 = vmul.f32 %v1200, 1.442695
    %v1203 = vpow.pop %v1202
    %v1204 = vmul.f32 %v1201, 1.442695
    %v1205 = vpow.pop %v1204
    %v1206 = vadd.f32 %v1203, 1.0
    %v1207 = vadd.f32 %v1205, 1.0
    %v1208 = vrcp.pop %v1206
    %v1209 = vmul.f32 1.0, %v1208
    %v1210 = vrcp.pop %v1207
    %v1211 = vmul.f32 1.0, %v1210
    %v1212 = vtanh.pop %v1182
    %v1213 = vtanh.pop %v1186
    %v1214 = vxor.u32 %v1183, 2147483648
    %v1215 = vxor.u32 %v1187, 2147483648
    %v1216 = vmul.f32 %v1214, 1.442695
    %v1217 = vpow.pop %v1216
    %v1218 = vmul.f32 %v1215, 1.442695
    %v1219 = vpow.pop %v1218
    %v1220 = vadd.f32 %v1217, 1.0
    %v1221 = vadd.f32 %v1219, 1.0
    %v1222 = vrcp.pop %v1220
    %v1223 = vmul.f32 1.0, %v1222
    %v1224 = vrcp.pop %v1221
    %v1225 = vmul.f32 1.0, %v1224
    %v1228 = vrot.slane %v1004, 7
    %v1229 = vrot.slane %v1005, 7
    %v1232 = vmul.f32 %v1209, %v1228
    %v1233 = vmul.f32 %v1211, %v1229
    %v1234 = vmul.f32 %v1197, %v1212
    %v1235 = vmul.f32 %v1199, %v1213
    %v1236 = vadd.f32 %v1232, %v1234
    %v1237 = vadd.f32 %v1233, %v1235
    %v1238 = vtanh.pop %v1236
    %v1239 = vtanh.pop %v1237
    %v1240 = vmul.f32 %v1223, %v1238
    %v1241 = vmul.f32 %v1225, %v1239
    %1242 = vst [vmem:[#allocation4] sm:$0x8] %v1240
    %1243 = vst [vmem:[#allocation4 + $0x8] sm:$0x8] %v1241
    %v1246 = vrot.slane %v1240, 3
    %v1247 = vrot.slane %v1241, 2
    %v1248 = vsel %vm556, %v1247, %v1246
    %1250 = vmatprep.subr.mxu0 %v268
    %1251 = vmatpush1.msra.mxu0 %v267
    %1252 = vmatprep.subr.mxu0 %v272
    %1253 = vmatpush1.msra.mxu0 %v271
    %1254 = vmatprep.subr.mxu0 %v276
    %1255 = vmatpush1.msra.mxu0 %v275
    %1256 = vmatprep.subr.mxu0 %v280
    %1257 = vmatpush1.msra.mxu0 %v279
    %1258 = vmatprep.subr.mxu0 %v284
    %1259 = vmatpush1.msra.mxu0 %v283
    %1260 = vmatprep.subr.mxu0 %v288
    %1261 = vmatpush1.msra.mxu0 %v287
    %1262 = vmatprep.subr.mxu0 %v292
    %1263 = vmatpush1.msra.mxu0 %v291
    %1264 = vmatprep.subr.mxu0 %v296
    %1265 = vmatpush1.msra.mxu0 %v295
    %1266 = vmatprep.subr.mxu0 %v300
    %1267 = vmatpush1.msra.mxu0 %v299
    %1268 = vmatprep.subr.mxu0 %v304
    %1269 = vmatpush1.msra.mxu0 %v303
    %1270 = vmatprep.subr.mxu0 %v308
    %1271 = vmatpush1.msra.mxu0 %v307
    %1272 = vmatprep.subr.mxu0 %v312
    %1273 = vmatpush1.msra.mxu0 %v311
    %1274 = vmatprep.subr.mxu0 %v316
    %1275 = vmatpush1.msra.mxu0 %v315
    %1276 = vmatprep.subr.mxu0 %v320
    %1277 = vmatpush1.msra.mxu0 %v319
    %1278 = vmatprep.subr.mxu0 %v324
    %1279 = vmatpush1.msra.mxu0 %v323
    %1280 = vmatprep.subr.mxu0 %v328
    %1281 = vmatpush1.msra.mxu0 %v327
    %1282 = vmatprep.subr.mxu0 0.0
    %1283 = vmatpush1.msra.mxu0 0.0
    %1284 = vmatprep.subr.mxu0 0.0
    %1285 = vmatpush1.msra.mxu0 0.0
    %1286 = vmatprep.subr.mxu0 0.0
    %1287 = vmatpush1.msra.mxu0 0.0
    %1288 = vmatprep.subr.mxu0 0.0
    %1289 = vmatpush1.msra.mxu0 0.0
    %1290 = vmatprep.subr.mxu0 0.0
    %1291 = vmatpush1.msra.mxu0 0.0
    %1292 = vmatprep.subr.mxu0 0.0
    %1293 = vmatpush1.msra.mxu0 0.0
    %1294 = vmatprep.subr.mxu0 0.0
    %1295 = vmatpush1.msra.mxu0 0.0
    %1296 = vmatprep.subr.mxu0 0.0
    %1297 = vmatpush1.msra.mxu0 0.0
    %1298 = vmatprep.subr.mxu0 0.0
    %1299 = vmatpush1.msra.mxu0 0.0
    %1300 = vmatprep.subr.mxu0 0.0
    %1301 = vmatpush1.msra.mxu0 0.0
    %1302 = vmatprep.subr.mxu0 0.0
    %1303 = vmatpush1.msra.mxu0 0.0
    %1304 = vmatprep.subr.mxu0 0.0
    %1305 = vmatpush1.msra.mxu0 0.0
    %1306 = vmatprep.subr.mxu0 0.0
    %1307 = vmatpush1.msra.mxu0 0.0
    %1308 = vmatprep.subr.mxu0 0.0
    %1309 = vmatpush1.msra.mxu0 0.0
    %1310 = vmatprep.subr.mxu0 0.0
    %1311 = vmatpush1.msra.mxu0 0.0
    %1312 = vmatprep.subr.mxu0 0.0
    %1313 = vmatpush1.msra.mxu0 0.0
    %1314 = vmatprep.mubr.f32.mxu0 0.0
    %1315 = vmatmul.mubr.f32.gmra.mrb[0].mxu0 %v1248
    %v1316 = vpop.f32.mrb[0].mxu0
    %v1317 = vadd.f32 0.0, %v1316
    %v1318 = vpop.f32.mrb[0].mxu0
    %v1319 = vadd.f32 0.0, %v1318
    %1320 = vdwg.mxu0
    %1321 = vmatprep.subr.mxu0 %v270
    %1322 = vmatpush1.msra.mxu0 %v269
    %1323 = vmatprep.subr.mxu0 %v274
    %1324 = vmatpush1.msra.mxu0 %v273
    %1325 = vmatprep.subr.mxu0 %v278
    %1326 = vmatpush1.msra.mxu0 %v277
    %1327 = vmatprep.subr.mxu0 %v282
    %1328 = vmatpush1.msra.mxu0 %v281
    %1329 = vmatprep.subr.mxu0 %v286
    %1330 = vmatpush1.msra.mxu0 %v285
    %1331 = vmatprep.subr.mxu0 %v290
    %1332 = vmatpush1.msra.mxu0 %v289
    %1333 = vmatprep.subr.mxu0 %v294
    %1334 = vmatpush1.msra.mxu0 %v293
    %1335 = vmatprep.subr.mxu0 %v298
    %1336 = vmatpush1.msra.mxu0 %v297
    %1337 = vmatprep.subr.mxu0 %v302
    %1338 = vmatpush1.msra.mxu0 %v301
    %1339 = vmatprep.subr.mxu0 %v306
    %1340 = vmatpush1.msra.mxu0 %v305
    %1341 = vmatprep.subr.mxu0 %v310
    %1342 = vmatpush1.msra.mxu0 %v309
    %1343 = vmatprep.subr.mxu0 %v314
    %1344 = vmatpush1.msra.mxu0 %v313
    %1345 = vmatprep.subr.mxu0 %v318
    %1346 = vmatpush1.msra.mxu0 %v317
    %1347 = vmatprep.subr.mxu0 %v322
    %1348 = vmatpush1.msra.mxu0 %v321
    %1349 = vmatprep.subr.mxu0 %v326
    %1350 = vmatpush1.msra.mxu0 %v325
    %1351 = vmatprep.subr.mxu0 %v330
    %1352 = vmatpush1.msra.mxu0 %v329
    %1353 = vmatprep.subr.mxu0 0.0
    %1354 = vmatpush1.msra.mxu0 0.0
    %1355 = vmatprep.subr.mxu0 0.0
    %1356 = vmatpush1.msra.mxu0 0.0
    %1357 = vmatprep.subr.mxu0 0.0
    %1358 = vmatpush1.msra.mxu0 0.0
    %1359 = vmatprep.subr.mxu0 0.0
    %1360 = vmatpush1.msra.mxu0 0.0
    %1361 = vmatprep.subr.mxu0 0.0
    %1362 = vmatpush1.msra.mxu0 0.0
    %1363 = vmatprep.subr.mxu0 0.0
    %1364 = vmatpush1.msra.mxu0 0.0
    %1365 = vmatprep.subr.mxu0 0.0
    %1366 = vmatpush1.msra.mxu0 0.0
    %1367 = vmatprep.subr.mxu0 0.0
    %1368 = vmatpush1.msra.mxu0 0.0
    %1369 = vmatprep.subr.mxu0 0.0
    %1370 = vmatpush1.msra.mxu0 0.0
    %1371 = vmatprep.subr.mxu0 0.0
    %1372 = vmatpush1.msra.mxu0 0.0
    %1373 = vmatprep.subr.mxu0 0.0
    %1374 = vmatpush1.msra.mxu0 0.0
    %1375 = vmatprep.subr.mxu0 0.0
    %1376 = vmatpush1.msra.mxu0 0.0
    %1377 = vmatprep.subr.mxu0 0.0
    %1378 = vmatpush1.msra.mxu0 0.0
    %1379 = vmatprep.subr.mxu0 0.0
    %1380 = vmatpush1.msra.mxu0 0.0
    %1381 = vmatprep.subr.mxu0 0.0
    %1382 = vmatpush1.msra.mxu0 0.0
    %1383 = vmatprep.subr.mxu0 0.0
    %1384 = vmatpush1.msra.mxu0 0.0
    %1385 = vmatprep.mubr.f32.mxu0 0.0
    %1386 = vmatmul.mubr.f32.gmra.mrb[0].mxu0 %v1248
    %v1387 = vpop.f32.mrb[0].mxu0
    %v1388 = vadd.f32 0.0, %v1387
    %v1389 = vpop.f32.mrb[0].mxu0
    %v1390 = vadd.f32 0.0, %v1389
    %1391 = vdwg.mxu0
    %v1396 = vrot.slane %v1317, 4
    %v1397 = vrot.slane %v1319, 4
    %v1398 = vrot.slane %v1388, 4
    %v1399 = vrot.slane %v1390, 4
    %v1400 = vrot.slane %v1317, 5
    %v1401 = vrot.slane %v1319, 5
    %v1402 = vrot.slane %v1388, 5
    %v1403 = vrot.slane %v1390, 5
    %v1412 = vadd.f32 %v180, %v1396
    %v1413 = vadd.f32 %v182, %v1397
    %v1414 = vadd.f32 %v257, %v1398
    %v1415 = vadd.f32 %v259, %v1399
    %v1416 = vadd.f32 %v186, %v1400
    %v1417 = vadd.f32 %v188, %v1401
    %v1418 = vadd.f32 %v263, %v1402
    %v1419 = vadd.f32 %v265, %v1403
    %v1420 = vxor.u32 %v1412, 2147483648
    %v1421 = vxor.u32 %v1416, 2147483648
    %v1422 = vmul.f32 %v1420, 1.442695
    %v1423 = vpow.pop %v1422
    %v1424 = vmul.f32 %v1421, 1.442695
    %v1425 = vpow.pop %v1424
    %v1426 = vadd.f32 %v1423, 1.0
    %v1427 = vadd.f32 %v1425, 1.0
    %v1428 = vrcp.pop %v1426
    %v1429 = vmul.f32 1.0, %v1428
    %v1430 = vrcp.pop %v1427
    %v1431 = vmul.f32 1.0, %v1430
    %v1432 = vxor.u32 %v1413, 2147483648
    %v1433 = vxor.u32 %v1417, 2147483648
    %v1434 = vmul.f32 %v1432, 1.442695
    %v1435 = vpow.pop %v1434
    %v1436 = vmul.f32 %v1433, 1.442695
    %v1437 = vpow.pop %v1436
    %v1438 = vadd.f32 %v1435, 1.0
    %v1439 = vadd.f32 %v1437, 1.0
    %v1440 = vrcp.pop %v1438
    %v1441 = vmul.f32 1.0, %v1440
    %v1442 = vrcp.pop %v1439
    %v1443 = vmul.f32 1.0, %v1442
    %v1444 = vtanh.pop %v1414
    %v1445 = vtanh.pop %v1418
    %v1446 = vxor.u32 %v1415, 2147483648
    %v1447 = vxor.u32 %v1419, 2147483648
    %v1448 = vmul.f32 %v1446, 1.442695
    %v1449 = vpow.pop %v1448
    %v1450 = vmul.f32 %v1447, 1.442695
    %v1451 = vpow.pop %v1450
    %v1452 = vadd.f32 %v1449, 1.0
    %v1453 = vadd.f32 %v1451, 1.0
    %v1454 = vrcp.pop %v1452
    %v1455 = vmul.f32 1.0, %v1454
    %v1456 = vrcp.pop %v1453
    %v1457 = vmul.f32 1.0, %v1456
    %v1460 = vrot.slane %v1236, 7
    %v1461 = vrot.slane %v1237, 7
    %v1464 = vmul.f32 %v1441, %v1460
    %v1465 = vmul.f32 %v1443, %v1461
    %v1466 = vmul.f32 %v1429, %v1444
    %v1467 = vmul.f32 %v1431, %v1445
    %v1468 = vadd.f32 %v1464, %v1466
    %v1469 = vadd.f32 %v1465, %v1467
    %v1470 = vtanh.pop %v1468
    %v1471 = vtanh.pop %v1469
    %v1472 = vmul.f32 %v1455, %v1470
    %v1473 = vmul.f32 %v1457, %v1471
    %1474 = vst [vmem:[#allocation4] sm:$0x10] %v1472
    %1475 = vst [vmem:[#allocation4 + $0x8] sm:$0x10] %v1473
    %v1478 = vrot.slane %v1472, 4
    %v1479 = vrot.slane %v1473, 3
    %v1480 = vsel %vm556, %v1479, %v1478
    %1482 = vmatprep.subr.mxu0 %v268
    %1483 = vmatpush1.msra.mxu0 %v267
    %1484 = vmatprep.subr.mxu0 %v272
    %1485 = vmatpush1.msra.mxu0 %v271
    %1486 = vmatprep.subr.mxu0 %v276
    %1487 = vmatpush1.msra.mxu0 %v275
    %1488 = vmatprep.subr.mxu0 %v280
    %1489 = vmatpush1.msra.mxu0 %v279
    %1490 = vmatprep.subr.mxu0 %v284
    %1491 = vmatpush1.msra.mxu0 %v283
    %1492 = vmatprep.subr.mxu0 %v288
    %1493 = vmatpush1.msra.mxu0 %v287
    %1494 = vmatprep.subr.mxu0 %v292
    %1495 = vmatpush1.msra.mxu0 %v291
    %1496 = vmatprep.subr.mxu0 %v296
    %1497 = vmatpush1.msra.mxu0 %v295
    %1498 = vmatprep.subr.mxu0 %v300
    %1499 = vmatpush1.msra.mxu0 %v299
    %1500 = vmatprep.subr.mxu0 %v304
    %1501 = vmatpush1.msra.mxu0 %v303
    %1502 = vmatprep.subr.mxu0 %v308
    %1503 = vmatpush1.msra.mxu0 %v307
    %1504 = vmatprep.subr.mxu0 %v312
    %1505 = vmatpush1.msra.mxu0 %v311
    %1506 = vmatprep.subr.mxu0 %v316
    %1507 = vmatpush1.msra.mxu0 %v315
    %1508 = vmatprep.subr.mxu0 %v320
    %1509 = vmatpush1.msra.mxu0 %v319
    %1510 = vmatprep.subr.mxu0 %v324
    %1511 = vmatpush1.msra.mxu0 %v323
    %1512 = vmatprep.subr.mxu0 %v328
    %1513 = vmatpush1.msra.mxu0 %v327
    %1514 = vmatprep.subr.mxu0 0.0
    %1515 = vmatpush1.msra.mxu0 0.0
    %1516 = vmatprep.subr.mxu0 0.0
    %1517 = vmatpush1.msra.mxu0 0.0
    %1518 = vmatprep.subr.mxu0 0.0
    %1519 = vmatpush1.msra.mxu0 0.0
    %1520 = vmatprep.subr.mxu0 0.0
    %1521 = vmatpush1.msra.mxu0 0.0
    %1522 = vmatprep.subr.mxu0 0.0
    %1523 = vmatpush1.msra.mxu0 0.0
    %1524 = vmatprep.subr.mxu0 0.0
    %1525 = vmatpush1.msra.mxu0 0.0
    %1526 = vmatprep.subr.mxu0 0.0
    %1527 = vmatpush1.msra.mxu0 0.0
    %1528 = vmatprep.subr.mxu0 0.0
    %1529 = vmatpush1.msra.mxu0 0.0
    %1530 = vmatprep.subr.mxu0 0.0
    %1531 = vmatpush1.msra.mxu0 0.0
    %1532 = vmatprep.subr.mxu0 0.0
    %1533 = vmatpush1.msra.mxu0 0.0
    %1534 = vmatprep.subr.mxu0 0.0
    %1535 = vmatpush1.msra.mxu0 0.0
    %1536 = vmatprep.subr.mxu0 0.0
    %1537 = vmatpush1.msra.mxu0 0.0
    %1538 = vmatprep.subr.mxu0 0.0
    %1539 = vmatpush1.msra.mxu0 0.0
    %1540 = vmatprep.subr.mxu0 0.0
    %1541 = vmatpush1.msra.mxu0 0.0
    %1542 = vmatprep.subr.mxu0 0.0
    %1543 = vmatpush1.msra.mxu0 0.0
    %1544 = vmatprep.subr.mxu0 0.0
    %1545 = vmatpush1.msra.mxu0 0.0
    %1546 = vmatprep.mubr.f32.mxu0 0.0
    %1547 = vmatmul.mubr.f32.gmra.mrb[0].mxu0 %v1480
    %v1548 = vpop.f32.mrb[0].mxu0
    %v1549 = vadd.f32 0.0, %v1548
    %v1550 = vpop.f32.mrb[0].mxu0
    %v1551 = vadd.f32 0.0, %v1550
    %1552 = vdwg.mxu0
    %1553 = vmatprep.subr.mxu0 %v270
    %1554 = vmatpush1.msra.mxu0 %v269
    %1555 = vmatprep.subr.mxu0 %v274
    %1556 = vmatpush1.msra.mxu0 %v273
    %1557 = vmatprep.subr.mxu0 %v278
    %1558 = vmatpush1.msra.mxu0 %v277
    %1559 = vmatprep.subr.mxu0 %v282
    %1560 = vmatpush1.msra.mxu0 %v281
    %1561 = vmatprep.subr.mxu0 %v286
    %1562 = vmatpush1.msra.mxu0 %v285
    %1563 = vmatprep.subr.mxu0 %v290
    %1564 = vmatpush1.msra.mxu0 %v289
    %1565 = vmatprep.subr.mxu0 %v294
    %1566 = vmatpush1.msra.mxu0 %v293
    %1567 = vmatprep.subr.mxu0 %v298
    %1568 = vmatpush1.msra.mxu0 %v297
    %1569 = vmatprep.subr.mxu0 %v302
    %1570 = vmatpush1.msra.mxu0 %v301
    %1571 = vmatprep.subr.mxu0 %v306
    %1572 = vmatpush1.msra.mxu0 %v305
    %1573 = vmatprep.subr.mxu0 %v310
    %1574 = vmatpush1.msra.mxu0 %v309
    %1575 = vmatprep.subr.mxu0 %v314
    %1576 = vmatpush1.msra.mxu0 %v313
    %1577 = vmatprep.subr.mxu0 %v318
    %1578 = vmatpush1.msra.mxu0 %v317
    %1579 = vmatprep.subr.mxu0 %v322
    %1580 = vmatpush1.msra.mxu0 %v321
    %1581 = vmatprep.subr.mxu0 %v326
    %1582 = vmatpush1.msra.mxu0 %v325
    %1583 = vmatprep.subr.mxu0 %v330
    %1584 = vmatpush1.msra.mxu0 %v329
    %1585 = vmatprep.subr.mxu0 0.0
    %1586 = vmatpush1.msra.mxu0 0.0
    %1587 = vmatprep.subr.mxu0 0.0
    %1588 = vmatpush1.msra.mxu0 0.0
    %1589 = vmatprep.subr.mxu0 0.0
    %1590 = vmatpush1.msra.mxu0 0.0
    %1591 = vmatprep.subr.mxu0 0.0
    %1592 = vmatpush1.msra.mxu0 0.0
    %1593 = vmatprep.subr.mxu0 0.0
    %1594 = vmatpush1.msra.mxu0 0.0
    %1595 = vmatprep.subr.mxu0 0.0
    %1596 = vmatpush1.msra.mxu0 0.0
    %1597 = vmatprep.subr.mxu0 0.0
    %1598 = vmatpush1.msra.mxu0 0.0
    %1599 = vmatprep.subr.mxu0 0.0
    %1600 = vmatpush1.msra.mxu0 0.0
    %1601 = vmatprep.subr.mxu0 0.0
    %1602 = vmatpush1.msra.mxu0 0.0
    %1603 = vmatprep.subr.mxu0 0.0
    %1604 = vmatpush1.msra.mxu0 0.0
    %1605 = vmatprep.subr.mxu0 0.0
    %1606 = vmatpush1.msra.mxu0 0.0
    %1607 = vmatprep.subr.mxu0 0.0
    %1608 = vmatpush1.msra.mxu0 0.0
    %1609 = vmatprep.subr.mxu0 0.0
    %1610 = vmatpush1.msra.mxu0 0.0
    %1611 = vmatprep.subr.mxu0 0.0
    %1612 = vmatpush1.msra.mxu0 0.0
    %1613 = vmatprep.subr.mxu0 0.0
    %1614 = vmatpush1.msra.mxu0 0.0
    %1615 = vmatprep.subr.mxu0 0.0
    %1616 = vmatpush1.msra.mxu0 0.0
    %1617 = vmatprep.mubr.f32.mxu0 0.0
    %1618 = vmatmul.mubr.f32.gmra.mrb[0].mxu0 %v1480
    %v1619 = vpop.f32.mrb[0].mxu0
    %v1620 = vadd.f32 0.0, %v1619
    %v1621 = vpop.f32.mrb[0].mxu0
    %v1622 = vadd.f32 0.0, %v1621
    %1623 = vdwg.mxu0
    %v1628 = vrot.slane %v1549, 3
    %v1629 = vrot.slane %v1551, 3
    %v1630 = vrot.slane %v1620, 3
    %v1631 = vrot.slane %v1622, 3
    %v1632 = vrot.slane %v1549, 4
    %v1633 = vrot.slane %v1551, 4
    %v1634 = vrot.slane %v1620, 4
    %v1635 = vrot.slane %v1622, 4
    %v1644 = vadd.f32 %v180, %v1628
    %v1645 = vadd.f32 %v182, %v1629
    %v1646 = vadd.f32 %v257, %v1630
    %v1647 = vadd.f32 %v259, %v1631
    %v1648 = vadd.f32 %v186, %v1632
    %v1649 = vadd.f32 %v188, %v1633
    %v1650 = vadd.f32 %v263, %v1634
    %v1651 = vadd.f32 %v265, %v1635
    %v1652 = vxor.u32 %v1644, 2147483648
    %v1653 = vxor.u32 %v1648, 2147483648
    %v1654 = vmul.f32 %v1652, 1.442695
    %v1655 = vpow.pop %v1654
    %v1656 = vmul.f32 %v1653, 1.442695
    %v1657 = vpow.pop %v1656
    %v1658 = vadd.f32 %v1655, 1.0
    %v1659 = vadd.f32 %v1657, 1.0
    %v1660 = vrcp.pop %v1658
    %v1661 = vmul.f32 1.0, %v1660
    %v1662 = vrcp.pop %v1659
    %v1663 = vmul.f32 1.0, %v1662
    %v1664 = vxor.u32 %v1645, 2147483648
    %v1665 = vxor.u32 %v1649, 2147483648
    %v1666 = vmul.f32 %v1664, 1.442695
    %v1667 = vpow.pop %v1666
    %v1668 = vmul.f32 %v1665, 1.442695
    %v1669 = vpow.pop %v1668
    %v1670 = vadd.f32 %v1667, 1.0
    %v1671 = vadd.f32 %v1669, 1.0
    %v1672 = vrcp.pop %v1670
    %v1673 = vmul.f32 1.0, %v1672
    %v1674 = vrcp.pop %v1671
    %v1675 = vmul.f32 1.0, %v1674
    %v1676 = vtanh.pop %v1646
    %v1677 = vtanh.pop %v1650
    %v1678 = vxor.u32 %v1647, 2147483648
    %v1679 = vxor.u32 %v1651, 2147483648
    %v1680 = vmul.f32 %v1678, 1.442695
    %v1681 = vpow.pop %v1680
    %v1682 = vmul.f32 %v1679, 1.442695
    %v1683 = vpow.pop %v1682
    %v1684 = vadd.f32 %v1681, 1.0
    %v1685 = vadd.f32 %v1683, 1.0
    %v1686 = vrcp.pop %v1684
    %v1687 = vmul.f32 1.0, %v1686
    %v1688 = vrcp.pop %v1685
    %v1689 = vmul.f32 1.0, %v1688
    %v1692 = vrot.slane %v1468, 7
    %v1693 = vrot.slane %v1469, 7
    %v1696 = vmul.f32 %v1673, %v1692
    %v1697 = vmul.f32 %v1675, %v1693
    %v1698 = vmul.f32 %v1661, %v1676
    %v1699 = vmul.f32 %v1663, %v1677
    %v1700 = vadd.f32 %v1696, %v1698
    %v1701 = vadd.f32 %v1697, %v1699
    %v1702 = vtanh.pop %v1700
    %v1703 = vtanh.pop %v1701
    %v1704 = vmul.f32 %v1687, %v1702
    %v1705 = vmul.f32 %v1689, %v1703
    %1706 = vst [vmem:[#allocation4] sm:$0x20] %v1704
    %1707 = vst [vmem:[#allocation4 + $0x8] sm:$0x20] %v1705
    %v1710 = vrot.slane %v1704, 5
    %v1711 = vrot.slane %v1705, 4
    %v1712 = vsel %vm556, %v1711, %v1710
    %1714 = vmatprep.subr.mxu0 %v268
    %1715 = vmatpush1.msra.mxu0 %v267
    %1716 = vmatprep.subr.mxu0 %v272
    %1717 = vmatpush1.msra.mxu0 %v271
    %1718 = vmatprep.subr.mxu0 %v276
    %1719 = vmatpush1.msra.mxu0 %v275
    %1720 = vmatprep.subr.mxu0 %v280
    %1721 = vmatpush1.msra.mxu0 %v279
    %1722 = vmatprep.subr.mxu0 %v284
    %1723 = vmatpush1.msra.mxu0 %v283
    %1724 = vmatprep.subr.mxu0 %v288
    %1725 = vmatpush1.msra.mxu0 %v287
    %1726 = vmatprep.subr.mxu0 %v292
    %1727 = vmatpush1.msra.mxu0 %v291
    %1728 = vmatprep.subr.mxu0 %v296
    %1729 = vmatpush1.msra.mxu0 %v295
    %1730 = vmatprep.subr.mxu0 %v300
    %1731 = vmatpush1.msra.mxu0 %v299
    %1732 = vmatprep.subr.mxu0 %v304
    %1733 = vmatpush1.msra.mxu0 %v303
    %1734 = vmatprep.subr.mxu0 %v308
    %1735 = vmatpush1.msra.mxu0 %v307
    %1736 = vmatprep.subr.mxu0 %v312
    %1737 = vmatpush1.msra.mxu0 %v311
    %1738 = vmatprep.subr.mxu0 %v316
    %1739 = vmatpush1.msra.mxu0 %v315
    %1740 = vmatprep.subr.mxu0 %v320
    %1741 = vmatpush1.msra.mxu0 %v319
    %1742 = vmatprep.subr.mxu0 %v324
    %1743 = vmatpush1.msra.mxu0 %v323
    %1744 = vmatprep.subr.mxu0 %v328
    %1745 = vmatpush1.msra.mxu0 %v327
    %1746 = vmatprep.subr.mxu0 0.0
    %1747 = vmatpush1.msra.mxu0 0.0
    %1748 = vmatprep.subr.mxu0 0.0
    %1749 = vmatpush1.msra.mxu0 0.0
    %1750 = vmatprep.subr.mxu0 0.0
    %1751 = vmatpush1.msra.mxu0 0.0
    %1752 = vmatprep.subr.mxu0 0.0
    %1753 = vmatpush1.msra.mxu0 0.0
    %1754 = vmatprep.subr.mxu0 0.0
    %1755 = vmatpush1.msra.mxu0 0.0
    %1756 = vmatprep.subr.mxu0 0.0
    %1757 = vmatpush1.msra.mxu0 0.0
    %1758 = vmatprep.subr.mxu0 0.0
    %1759 = vmatpush1.msra.mxu0 0.0
    %1760 = vmatprep.subr.mxu0 0.0
    %1761 = vmatpush1.msra.mxu0 0.0
    %1762 = vmatprep.subr.mxu0 0.0
    %1763 = vmatpush1.msra.mxu0 0.0
    %1764 = vmatprep.subr.mxu0 0.0
    %1765 = vmatpush1.msra.mxu0 0.0
    %1766 = vmatprep.subr.mxu0 0.0
    %1767 = vmatpush1.msra.mxu0 0.0
    %1768 = vmatprep.subr.mxu0 0.0
    %1769 = vmatpush1.msra.mxu0 0.0
    %1770 = vmatprep.subr.mxu0 0.0
    %1771 = vmatpush1.msra.mxu0 0.0
    %1772 = vmatprep.subr.mxu0 0.0
    %1773 = vmatpush1.msra.mxu0 0.0
    %1774 = vmatprep.subr.mxu0 0.0
    %1775 = vmatpush1.msra.mxu0 0.0
    %1776 = vmatprep.subr.mxu0 0.0
    %1777 = vmatpush1.msra.mxu0 0.0
    %1778 = vmatprep.mubr.f32.mxu0 0.0
    %1779 = vmatmul.mubr.f32.gmra.mrb[0].mxu0 %v1712
    %v1780 = vpop.f32.mrb[0].mxu0
    %v1781 = vadd.f32 0.0, %v1780
    %v1782 = vpop.f32.mrb[0].mxu0
    %v1783 = vadd.f32 0.0, %v1782
    %1784 = vdwg.mxu0
    %1785 = vmatprep.subr.mxu0 %v270
    %1786 = vmatpush1.msra.mxu0 %v269
    %1787 = vmatprep.subr.mxu0 %v274
    %1788 = vmatpush1.msra.mxu0 %v273
    %1789 = vmatprep.subr.mxu0 %v278
    %1790 = vmatpush1.msra.mxu0 %v277
    %1791 = vmatprep.subr.mxu0 %v282
    %1792 = vmatpush1.msra.mxu0 %v281
    %1793 = vmatprep.subr.mxu0 %v286
    %1794 = vmatpush1.msra.mxu0 %v285
    %1795 = vmatprep.subr.mxu0 %v290
    %1796 = vmatpush1.msra.mxu0 %v289
    %1797 = vmatprep.subr.mxu0 %v294
    %1798 = vmatpush1.msra.mxu0 %v293
    %1799 = vmatprep.subr.mxu0 %v298
    %1800 = vmatpush1.msra.mxu0 %v297
    %1801 = vmatprep.subr.mxu0 %v302
    %1802 = vmatpush1.msra.mxu0 %v301
    %1803 = vmatprep.subr.mxu0 %v306
    %1804 = vmatpush1.msra.mxu0 %v305
    %1805 = vmatprep.subr.mxu0 %v310
    %1806 = vmatpush1.msra.mxu0 %v309
    %1807 = vmatprep.subr.mxu0 %v314
    %1808 = vmatpush1.msra.mxu0 %v313
    %1809 = vmatprep.subr.mxu0 %v318
    %1810 = vmatpush1.msra.mxu0 %v317
    %1811 = vmatprep.subr.mxu0 %v322
    %1812 = vmatpush1.msra.mxu0 %v321
    %1813 = vmatprep.subr.mxu0 %v326
    %1814 = vmatpush1.msra.mxu0 %v325
    %1815 = vmatprep.subr.mxu0 %v330
    %1816 = vmatpush1.msra.mxu0 %v329
    %1817 = vmatprep.subr.mxu0 0.0
    %1818 = vmatpush1.msra.mxu0 0.0
    %1819 = vmatprep.subr.mxu0 0.0
    %1820 = vmatpush1.msra.mxu0 0.0
    %1821 = vmatprep.subr.mxu0 0.0
    %1822 = vmatpush1.msra.mxu0 0.0
    %1823 = vmatprep.subr.mxu0 0.0
    %1824 = vmatpush1.msra.mxu0 0.0
    %1825 = vmatprep.subr.mxu0 0.0
    %1826 = vmatpush1.msra.mxu0 0.0
    %1827 = vmatprep.subr.mxu0 0.0
    %1828 = vmatpush1.msra.mxu0 0.0
    %1829 = vmatprep.subr.mxu0 0.0
    %1830 = vmatpush1.msra.mxu0 0.0
    %1831 = vmatprep.subr.mxu0 0.0
    %1832 = vmatpush1.msra.mxu0 0.0
    %1833 = vmatprep.subr.mxu0 0.0
    %1834 = vmatpush1.msra.mxu0 0.0
    %1835 = vmatprep.subr.mxu0 0.0
    %1836 = vmatpush1.msra.mxu0 0.0
    %1837 = vmatprep.subr.mxu0 0.0
    %1838 = vmatpush1.msra.mxu0 0.0
    %1839 = vmatprep.subr.mxu0 0.0
    %1840 = vmatpush1.msra.mxu0 0.0
    %1841 = vmatprep.subr.mxu0 0.0
    %1842 = vmatpush1.msra.mxu0 0.0
    %1843 = vmatprep.subr.mxu0 0.0
    %1844 = vmatpush1.msra.mxu0 0.0
    %1845 = vmatprep.subr.mxu0 0.0
    %1846 = vmatpush1.msra.mxu0 0.0
    %1847 = vmatprep.subr.mxu0 0.0
    %1848 = vmatpush1.msra.mxu0 0.0
    %1849 = vmatprep.mubr.f32.mxu0 0.0
    %1850 = vmatmul.mubr.f32.gmra.mrb[0].mxu0 %v1712
    %v1851 = vpop.f32.mrb[0].mxu0
    %v1852 = vadd.f32 0.0, %v1851
    %v1853 = vpop.f32.mrb[0].mxu0
    %v1854 = vadd.f32 0.0, %v1853
    %1855 = vdwg.mxu0
    %v1860 = vrot.slane %v1781, 2
    %v1861 = vrot.slane %v1783, 2
    %v1862 = vrot.slane %v1852, 2
    %v1863 = vrot.slane %v1854, 2
    %v1864 = vrot.slane %v1781, 3
    %v1865 = vrot.slane %v1783, 3
    %v1866 = vrot.slane %v1852, 3
    %v1867 = vrot.slane %v1854, 3
    %v1876 = vadd.f32 %v180, %v1860
    %v1877 = vadd.f32 %v182, %v1861
    %v1878 = vadd.f32 %v257, %v1862
    %v1879 = vadd.f32 %v259, %v1863
    %v1880 = vadd.f32 %v186, %v1864
    %v1881 = vadd.f32 %v188, %v1865
    %v1882 = vadd.f32 %v263, %v1866
    %v1883 = vadd.f32 %v265, %v1867
    %v1884 = vxor.u32 %v1876, 2147483648
    %v1885 = vxor.u32 %v1880, 2147483648
    %v1886 = vmul.f32 %v1884, 1.442695
    %v1887 = vpow.pop %v1886
    %v1888 = vmul.f32 %v1885, 1.442695
    %v1889 = vpow.pop %v1888
    %v1890 = vadd.f32 %v1887, 1.0
    %v1891 = vadd.f32 %v1889, 1.0
    %v1892 = vrcp.pop %v1890
    %v1893 = vmul.f32 1.0, %v1892
    %v1894 = vrcp.pop %v1891
    %v1895 = vmul.f32 1.0, %v1894
    %v1896 = vxor.u32 %v1877, 2147483648
    %v1897 = vxor.u32 %v1881, 2147483648
    %v1898 = vmul.f32 %v1896, 1.442695
    %v1899 = vpow.pop %v1898
    %v1900 = vmul.f32 %v1897, 1.442695
    %v1901 = vpow.pop %v1900
    %v1902 = vadd.f32 %v1899, 1.0
    %v1903 = vadd.f32 %v1901, 1.0
    %v1904 = vrcp.pop %v1902
    %v1905 = vmul.f32 1.0, %v1904
    %v1906 = vrcp.pop %v1903
    %v1907 = vmul.f32 1.0, %v1906
    %v1908 = vtanh.pop %v1878
    %v1909 = vtanh.pop %v1882
    %v1910 = vxor.u32 %v1879, 2147483648
    %v1911 = vxor.u32 %v1883, 2147483648
    %v1912 = vmul.f32 %v1910, 1.442695
    %v1913 = vpow.pop %v1912
    %v1914 = vmul.f32 %v1911, 1.442695
    %v1915 = vpow.pop %v1914
    %v1916 = vadd.f32 %v1913, 1.0
    %v1917 = vadd.f32 %v1915, 1.0
    %v1918 = vrcp.pop %v1916
    %v1919 = vmul.f32 1.0, %v1918
    %v1920 = vrcp.pop %v1917
    %v1921 = vmul.f32 1.0, %v1920
    %v1924 = vrot.slane %v1700, 7
    %v1925 = vrot.slane %v1701, 7
    %v1928 = vmul.f32 %v1905, %v1924
    %v1929 = vmul.f32 %v1907, %v1925
    %v1930 = vmul.f32 %v1893, %v1908
    %v1931 = vmul.f32 %v1895, %v1909
    %v1932 = vadd.f32 %v1928, %v1930
    %v1933 = vadd.f32 %v1929, %v1931
    %v1934 = vtanh.pop %v1932
    %v1935 = vtanh.pop %v1933
    %v1936 = vmul.f32 %v1919, %v1934
    %v1937 = vmul.f32 %v1921, %v1935
    %1938 = vst [vmem:[#allocation4] sm:$0x40] %v1936
    %1939 = vst [vmem:[#allocation4 + $0x8] sm:$0x40] %v1937
    %v1942 = vrot.slane %v1936, 6
    %v1943 = vrot.slane %v1937, 5
    %v1944 = vsel %vm556, %v1943, %v1942
    %1946 = vmatprep.subr.mxu0 %v268
    %1947 = vmatpush1.msra.mxu0 %v267
    %1948 = vmatprep.subr.mxu0 %v272
    %1949 = vmatpush1.msra.mxu0 %v271
    %1950 = vmatprep.subr.mxu0 %v276
    %1951 = vmatpush1.msra.mxu0 %v275
    %1952 = vmatprep.subr.mxu0 %v280
    %1953 = vmatpush1.msra.mxu0 %v279
    %1954 = vmatprep.subr.mxu0 %v284
    %1955 = vmatpush1.msra.mxu0 %v283
    %1956 = vmatprep.subr.mxu0 %v288
    %1957 = vmatpush1.msra.mxu0 %v287
    %1958 = vmatprep.subr.mxu0 %v292
    %1959 = vmatpush1.msra.mxu0 %v291
    %1960 = vmatprep.subr.mxu0 %v296
    %1961 = vmatpush1.msra.mxu0 %v295
    %1962 = vmatprep.subr.mxu0 %v300
    %1963 = vmatpush1.msra.mxu0 %v299
    %1964 = vmatprep.subr.mxu0 %v304
    %1965 = vmatpush1.msra.mxu0 %v303
    %1966 = vmatprep.subr.mxu0 %v308
    %1967 = vmatpush1.msra.mxu0 %v307
    %1968 = vmatprep.subr.mxu0 %v312
    %1969 = vmatpush1.msra.mxu0 %v311
    %1970 = vmatprep.subr.mxu0 %v316
    %1971 = vmatpush1.msra.mxu0 %v315
    %1972 = vmatprep.subr.mxu0 %v320
    %1973 = vmatpush1.msra.mxu0 %v319
    %1974 = vmatprep.subr.mxu0 %v324
    %1975 = vmatpush1.msra.mxu0 %v323
    %1976 = vmatprep.subr.mxu0 %v328
    %1977 = vmatpush1.msra.mxu0 %v327
    %1978 = vmatprep.subr.mxu0 0.0
    %1979 = vmatpush1.msra.mxu0 0.0
    %1980 = vmatprep.subr.mxu0 0.0
    %1981 = vmatpush1.msra.mxu0 0.0
    %1982 = vmatprep.subr.mxu0 0.0
    %1983 = vmatpush1.msra.mxu0 0.0
    %1984 = vmatprep.subr.mxu0 0.0
    %1985 = vmatpush1.msra.mxu0 0.0
    %1986 = vmatprep.subr.mxu0 0.0
    %1987 = vmatpush1.msra.mxu0 0.0
    %1988 = vmatprep.subr.mxu0 0.0
    %1989 = vmatpush1.msra.mxu0 0.0
    %1990 = vmatprep.subr.mxu0 0.0
    %1991 = vmatpush1.msra.mxu0 0.0
    %1992 = vmatprep.subr.mxu0 0.0
    %1993 = vmatpush1.msra.mxu0 0.0
    %1994 = vmatprep.subr.mxu0 0.0
    %1995 = vmatpush1.msra.mxu0 0.0
    %1996 = vmatprep.subr.mxu0 0.0
    %1997 = vmatpush1.msra.mxu0 0.0
    %1998 = vmatprep.subr.mxu0 0.0
    %1999 = vmatpush1.msra.mxu0 0.0
    %2000 = vmatprep.subr.mxu0 0.0
    %2001 = vmatpush1.msra.mxu0 0.0
    %2002 = vmatprep.subr.mxu0 0.0
    %2003 = vmatpush1.msra.mxu0 0.0
    %2004 = vmatprep.subr.mxu0 0.0
    %2005 = vmatpush1.msra.mxu0 0.0
    %2006 = vmatprep.subr.mxu0 0.0
    %2007 = vmatpush1.msra.mxu0 0.0
    %2008 = vmatprep.subr.mxu0 0.0
    %2009 = vmatpush1.msra.mxu0 0.0
    %2010 = vmatprep.mubr.f32.mxu0 0.0
    %2011 = vmatmul.mubr.f32.gmra.mrb[0].mxu0 %v1944
    %v2012 = vpop.f32.mrb[0].mxu0
    %v2013 = vadd.f32 0.0, %v2012
    %v2014 = vpop.f32.mrb[0].mxu0
    %v2015 = vadd.f32 0.0, %v2014
    %2016 = vdwg.mxu0
    %2017 = vmatprep.subr.mxu0 %v270
    %2018 = vmatpush1.msra.mxu0 %v269
    %2019 = vmatprep.subr.mxu0 %v274
    %2020 = vmatpush1.msra.mxu0 %v273
    %2021 = vmatprep.subr.mxu0 %v278
    %2022 = vmatpush1.msra.mxu0 %v277
    %2023 = vmatprep.subr.mxu0 %v282
    %2024 = vmatpush1.msra.mxu0 %v281
    %2025 = vmatprep.subr.mxu0 %v286
    %2026 = vmatpush1.msra.mxu0 %v285
    %2027 = vmatprep.subr.mxu0 %v290
    %2028 = vmatpush1.msra.mxu0 %v289
    %2029 = vmatprep.subr.mxu0 %v294
    %2030 = vmatpush1.msra.mxu0 %v293
    %2031 = vmatprep.subr.mxu0 %v298
    %2032 = vmatpush1.msra.mxu0 %v297
    %2033 = vmatprep.subr.mxu0 %v302
    %2034 = vmatpush1.msra.mxu0 %v301
    %2035 = vmatprep.subr.mxu0 %v306
    %2036 = vmatpush1.msra.mxu0 %v305
    %2037 = vmatprep.subr.mxu0 %v310
    %2038 = vmatpush1.msra.mxu0 %v309
    %2039 = vmatprep.subr.mxu0 %v314
    %2040 = vmatpush1.msra.mxu0 %v313
    %2041 = vmatprep.subr.mxu0 %v318
    %2042 = vmatpush1.msra.mxu0 %v317
    %2043 = vmatprep.subr.mxu0 %v322
    %2044 = vmatpush1.msra.mxu0 %v321
    %2045 = vmatprep.subr.mxu0 %v326
    %2046 = vmatpush1.msra.mxu0 %v325
    %2047 = vmatprep.subr.mxu0 %v330
    %2048 = vmatpush1.msra.mxu0 %v329
    %2049 = vmatprep.subr.mxu0 0.0
    %2050 = vmatpush1.msra.mxu0 0.0
    %2051 = vmatprep.subr.mxu0 0.0
    %2052 = vmatpush1.msra.mxu0 0.0
    %2053 = vmatprep.subr.mxu0 0.0
    %2054 = vmatpush1.msra.mxu0 0.0
    %2055 = vmatprep.subr.mxu0 0.0
    %2056 = vmatpush1.msra.mxu0 0.0
    %2057 = vmatprep.subr.mxu0 0.0
    %2058 = vmatpush1.msra.mxu0 0.0
    %2059 = vmatprep.subr.mxu0 0.0
    %2060 = vmatpush1.msra.mxu0 0.0
    %2061 = vmatprep.subr.mxu0 0.0
    %2062 = vmatpush1.msra.mxu0 0.0
    %2063 = vmatprep.subr.mxu0 0.0
    %2064 = vmatpush1.msra.mxu0 0.0
    %2065 = vmatprep.subr.mxu0 0.0
    %2066 = vmatpush1.msra.mxu0 0.0
    %2067 = vmatprep.subr.mxu0 0.0
    %2068 = vmatpush1.msra.mxu0 0.0
    %2069 = vmatprep.subr.mxu0 0.0
    %2070 = vmatpush1.msra.mxu0 0.0
    %2071 = vmatprep.subr.mxu0 0.0
    %2072 = vmatpush1.msra.mxu0 0.0
    %2073 = vmatprep.subr.mxu0 0.0
    %2074 = vmatpush1.msra.mxu0 0.0
    %2075 = vmatprep.subr.mxu0 0.0
    %2076 = vmatpush1.msra.mxu0 0.0
    %2077 = vmatprep.subr.mxu0 0.0
    %2078 = vmatpush1.msra.mxu0 0.0
    %2079 = vmatprep.subr.mxu0 0.0
    %2080 = vmatpush1.msra.mxu0 0.0
    %2081 = vmatprep.mubr.f32.mxu0 0.0
    %2082 = vmatmul.mubr.f32.gmra.mrb[0].mxu0 %v1944
    %v2083 = vpop.f32.mrb[0].mxu0
    %v2084 = vadd.f32 0.0, %v2083
    %v2085 = vpop.f32.mrb[0].mxu0
    %v2086 = vadd.f32 0.0, %v2085
    %2087 = vdwg.mxu0
    %v2092 = vrot.slane %v2013, 1
    %v2093 = vrot.slane %v2015, 1
    %v2094 = vrot.slane %v2084, 1
    %v2095 = vrot.slane %v2086, 1
    %v2096 = vrot.slane %v2013, 2
    %v2097 = vrot.slane %v2015, 2
    %v2098 = vrot.slane %v2084, 2
    %v2099 = vrot.slane %v2086, 2
    %v2108 = vadd.f32 %v180, %v2092
    %v2109 = vadd.f32 %v182, %v2093
    %v2110 = vadd.f32 %v257, %v2094
    %v2111 = vadd.f32 %v259, %v2095
    %v2112 = vadd.f32 %v186, %v2096
    %v2113 = vadd.f32 %v188, %v2097
    %v2114 = vadd.f32 %v263, %v2098
    %v2115 = vadd.f32 %v265, %v2099
    %v2116 = vxor.u32 %v2108, 2147483648
    %v2117 = vxor.u32 %v2112, 2147483648
    %v2118 = vmul.f32 %v2116, 1.442695
    %v2119 = vpow.pop %v2118
    %v2120 = vmul.f32 %v2117, 1.442695
    %v2121 = vpow.pop %v2120
    %v2122 = vadd.f32 %v2119, 1.0
    %v2123 = vadd.f32 %v2121, 1.0
    %v2124 = vrcp.pop %v2122
    %v2125 = vmul.f32 1.0, %v2124
    %v2126 = vrcp.pop %v2123
    %v2127 = vmul.f32 1.0, %v2126
    %v2128 = vxor.u32 %v2109, 2147483648
    %v2129 = vxor.u32 %v2113, 2147483648
    %v2130 = vmul.f32 %v2128, 1.442695
    %v2131 = vpow.pop %v2130
    %v2132 = vmul.f32 %v2129, 1.442695
    %v2133 = vpow.pop %v2132
    %v2134 = vadd.f32 %v2131, 1.0
    %v2135 = vadd.f32 %v2133, 1.0
    %v2136 = vrcp.pop %v2134
    %v2137 = vmul.f32 1.0, %v2136
    %v2138 = vrcp.pop %v2135
    %v2139 = vmul.f32 1.0, %v2138
    %v2140 = vtanh.pop %v2110
    %v2141 = vtanh.pop %v2114
    %v2142 = vxor.u32 %v2111, 2147483648
    %v2143 = vxor.u32 %v2115, 2147483648
    %v2144 = vmul.f32 %v2142, 1.442695
    %v2145 = vpow.pop %v2144
    %v2146 = vmul.f32 %v2143, 1.442695
    %v2147 = vpow.pop %v2146
    %v2148 = vadd.f32 %v2145, 1.0
    %v2149 = vadd.f32 %v2147, 1.0
    %v2150 = vrcp.pop %v2148
    %v2151 = vmul.f32 1.0, %v2150
    %v2152 = vrcp.pop %v2149
    %v2153 = vmul.f32 1.0, %v2152
    %v2156 = vrot.slane %v1932, 7
    %v2157 = vrot.slane %v1933, 7
    %v2160 = vmul.f32 %v2137, %v2156
    %v2161 = vmul.f32 %v2139, %v2157
    %v2162 = vmul.f32 %v2125, %v2140
    %v2163 = vmul.f32 %v2127, %v2141
    %v2164 = vadd.f32 %v2160, %v2162
    %v2165 = vadd.f32 %v2161, %v2163
    %v2166 = vtanh.pop %v2164
    %v2167 = vtanh.pop %v2165
    %v2168 = vmul.f32 %v2151, %v2166
    %v2169 = vmul.f32 %v2153, %v2167
    %2170 = vst [vmem:[#allocation4] sm:$0x80] %v2168
    %2171 = vst [vmem:[#allocation4 + $0x8] sm:$0x80] %v2169
    %v2174 = vrot.slane %v2169, 7
    %2177 = vst [vmem:[#allocation2 - $0x7] sm:$0x80] %v2168
    %2178 = vst [vmem:[#allocation2 + $0x1] sm:$0x1] %v2174
    %v2181 = vrot.slane %v2165, 7
    %2184 = vst [vmem:[#allocation3 - $0x7] sm:$0x80] %v2164
    %2185 = vst [vmem:[#allocation3 + $0x1] sm:$0x1] %v2181
    // Predicated region
    $region26: #{encoder_forward.1} parent=1 // pred_check
      _
    $region27: #{encoder_forward.1} parent=1 // pred_check_branch
      %2187 = sbr.rel (0) target = $region29
    $region28: #{encoder_forward.1} parent=1 // pred_region
      _
    $region29: #{encoder_forward.1} parent=1 // pred_fallthru
      _
    // Predicated region
    $region30: #{encoder_forward.1} parent=1 // pred_check
      _
    $region31: #{encoder_forward.1} parent=1 // pred_check_branch
      %2189 = sbr.rel (0) target = $region33
    $region32: #{encoder_forward.1} parent=1 // pred_region
      %s2191 = ssub.s32 256, 256
      %2192 = vsyncadd [#allocation5], %s2191
      %s2193 = sshll.u32 [#allocation4], 4
      %s2194 = int_to_ptr.vmem [resolvable:$true] %s2193
      %2199 = dma.vmem_to_hbm [thread:$0]  %s2194, 256, %s6, [#allocation5], 128, 128, 8
    $region33: #{encoder_forward.1} parent=1 // pred_fallthru
      _
    // Predicated region
    $region34: #{encoder_forward.1} parent=1 // pred_check
      _
    $region35: #{encoder_forward.1} parent=1 // pred_check_branch
      %2201 = sbr.rel (0) target = $region37
    $region36: #{encoder_forward.1} parent=1 // pred_region
      _
    $region37: #{encoder_forward.1} parent=1 // pred_fallthru
      _
    // Predicated region
    $region38: #{encoder_forward.1} parent=1 // pred_check
      _
    $region39: #{encoder_forward.1} parent=1 // pred_check_branch
      %2203 = sbr.rel (0) target = $region41
    $region40: #{encoder_forward.1} parent=1 // pred_region
      %2204 = dma.done [#allocation5], 256
    $region41: #{encoder_forward.1} parent=1 // pred_fallthru
      _
    %2205 = vsyncpa [#allocation5], 1

</llo_original>
